<compile_context>
chip_gen: v6e
topology: v6e:2x2x1
jax: 0.10.0
libtpu: 0.0.40
codegen_flags: <defaults>
</compile_context>

<pallas_src>
import functools

import jax
import jax.numpy as jnp
from jax import lax
from jax.experimental import pallas as pl
from jax.experimental.pallas import tpu as pltpu


CFG = dict(vocab=100, max_pos=16, hidden=32, heads=2, intermediate=64,
           layers=2, num_classes=3)
LN_EPS = 1e-12
LANE = 128          # lane-dense padding width (QKV, FFN intermediate, logits)


# ----------------------------------------------------------------------------
# in-kernel helpers
# ----------------------------------------------------------------------------

def _mm(a_bf16, b_bf16):
    """MXU matmul: bf16 operands, f32 accumulation."""
    return jnp.dot(a_bf16, b_bf16, preferred_element_type=jnp.float32)


def _layernorm(x, g, b, eps):
    mean = jnp.mean(x, axis=-1, keepdims=True)
    var = jnp.mean((x - mean) ** 2, axis=-1, keepdims=True)
    return (x - mean) * lax.rsqrt(var + eps) * g + b


def _gelu(x):
    # TODO(synk): HF BERT uses exact erf-GELU; tanh approximation used here.
    c = jnp.float32(0.7978845608028654)   # sqrt(2/pi)
    return 0.5 * x * (1.0 + jnp.tanh(c * (x + 0.044715 * x * x * x)))


# ----------------------------------------------------------------------------
# single fused kernel: embedding-LN -> L encoder layers -> pooler -> classifier
# ----------------------------------------------------------------------------

def _model_kernel(x_emb_ref, mask_ref, emb_g_ref, emb_b_ref,
                  wqkv_ref, bqkv_ref, wo_ref, bo_ref,
                  ln1_g_ref, ln1_b_ref,
                  w1_ref, b1_ref, w2_ref, b2_ref,
                  ln2_g_ref, ln2_b_ref,
                  pool_w_ref, pool_b_ref, cls_w_ref, cls_b_ref,
                  o_ref, *, B, S, nh, hd, L, scale, eps):
    H = nh * hd
    bf16 = jnp.bfloat16

    # embedding LayerNorm (f32)
    x = _layernorm(x_emb_ref[...], emb_g_ref[...], emb_b_ref[...], eps)
    mask = mask_ref[...]                                   # (B, 1, S), additive

    for l in range(L):                                     # static unroll, L=2
        # --- fused QKV projection: one lane-dense (BS,H)@(H,128) GEMM --------
        xb = x.astype(bf16)                                # single cast, reused
        qkv = _mm(xb, wqkv_ref[l]) + bqkv_ref[l]           # (BS, 128), f32
        qkv_b = qkv.astype(bf16)                           # single cast for q/k/v

        # --- per-head attention (nh=2, tiny static loop; hd=16) --------------
        ctx_heads = []
        for h in range(nh):
            q = qkv_b[:, h * hd:(h + 1) * hd].reshape(B, S, hd)
            k = qkv_b[:, H + h * hd:H + (h + 1) * hd].reshape(B, S, hd)
            v = qkv_b[:, 2 * H + h * hd:2 * H + (h + 1) * hd].reshape(B, S, hd)
            s = jnp.einsum("bqd,bkd->bqk", q, k,
                           preferred_element_type=jnp.float32) * scale + mask
            s = s - jnp.max(s, axis=-1, keepdims=True)
            p = jnp.exp(s)
            p = p * pl.reciprocal(jnp.sum(p, axis=-1, keepdims=True), approx=True)
            c = jnp.einsum("bqk,bkd->bqd", p.astype(bf16), v,
                           preferred_element_type=jnp.float32)
            ctx_heads.append(c.reshape(B * S, hd))

        # --- single output projection on concatenated context ----------------
        ctx = jnp.concatenate(ctx_heads, axis=-1)          # (BS, H)
        attn = _mm(ctx.astype(bf16), wo_ref[l]) + bo_ref[l]
        x = _layernorm(attn + x, ln1_g_ref[l], ln1_b_ref[l], eps)

        # --- feed-forward (GELU), lane-padded intermediate (BS, 128) ---------
        h1 = _gelu(_mm(x.astype(bf16), w1_ref[l]) + b1_ref[l])
        h2 = _mm(h1.astype(bf16), w2_ref[l]) + b2_ref[l]
        x = _layernorm(h2 + x, ln2_g_ref[l], ln2_b_ref[l], eps)

    # --- pooler (tanh on [CLS]) + classifier, lane-dense (B, 128) output -----
    cls = x.reshape(B, S, H)[:, 0, :]                      # (B, H)
    pooled = jnp.tanh(_mm(cls.astype(bf16), pool_w_ref[...]) + pool_b_ref[...])
    o_ref[...] = _mm(pooled.astype(bf16), cls_w_ref[...]) + cls_b_ref[...]


def run_model(x_emb2d, mask_add, p, cfg):
    H, nh, L = cfg["hidden"], cfg["heads"], cfg["layers"]
    B = mask_add.shape[0]
    BS = x_emb2d.shape[0]
    S = BS // B
    hd = H // nh
    scale = 1.0 / float(hd) ** 0.5

    vm = pl.BlockSpec(memory_space=pltpu.MemorySpace.VMEM)
    kernel = functools.partial(_model_kernel, B=B, S=S, nh=nh, hd=hd, L=L,
                               scale=scale, eps=LN_EPS)
    args = (x_emb2d, mask_add, p["emb_ln_g"], p["emb_ln_b"],
            p["wqkv"], p["bqkv"], p["wo"], p["bo"],
            p["ln1_g"], p["ln1_b"], p["w1"], p["b1"], p["w2"], p["b2"],
            p["ln2_g"], p["ln2_b"],
            p["pool_w"], p["pool_b"], p["cls_w_pad"], p["cls_b_pad"])
    return pl.pallas_call(
        kernel,
        out_shape=jax.ShapeDtypeStruct((B, LANE), jnp.float32),
        in_specs=[vm] * len(args),
        out_specs=vm,
    )(*args)


# ----------------------------------------------------------------------------
# Synthetic BERT + classifier parameters (deterministic init, padded layouts)
# ----------------------------------------------------------------------------

def init_params(key, cfg):
    H, I, L = cfg["hidden"], cfg["intermediate"], cfg["layers"]
    NC = cfg["num_classes"]
    keys = iter(jax.random.split(key, 16))

    def rnd(shape):
        return (0.02 * jax.random.normal(next(keys), shape)).astype(jnp.float32)

    def pad_last(a, to):
        return jnp.pad(a, [(0, 0)] * (a.ndim - 1) + [(0, to - a.shape[-1])])

    # packed QKV: columns [0:H]=Wq, [H:2H]=Wk, [2H:3H]=Wv (heads packed by hd),
    # zero-padded 3H=96 -> 128 lanes.
    wqkv = pad_last(rnd((L, H, 3 * H)), LANE).astype(jnp.bfloat16)
    # FFN: intermediate I=64 zero-padded to 128 lanes on both sides.
    w1 = pad_last(rnd((L, H, I)), LANE).astype(jnp.bfloat16)          # (L,H,128)
    w2 = jnp.pad(rnd((L, I, H)),
                 ((0, 0), (0, LANE - I), (0, 0))).astype(jnp.bfloat16)  # (L,128,H)
    cls_w = pad_last(rnd((H, NC)), LANE).astype(jnp.bfloat16)          # (H,128)

    zeros = lambda s: jnp.zeros(s, jnp.float32)
    ones = lambda s: jnp.ones(s, jnp.float32)

    return {
        # embeddings (gathered in plain JAX, f32)
        "word_emb": rnd((cfg["vocab"], H)),
        "pos_emb": rnd((cfg["max_pos"], H)),
        "type_emb": rnd((2, H)),
        "emb_ln_g": ones((1, H)), "emb_ln_b": zeros((1, H)),
        # encoder layers, stacked on leading L axis, lane-padded
        "wqkv": wqkv, "bqkv": zeros((L, 1, LANE)),
        "wo": rnd((L, H, H)).astype(jnp.bfloat16), "bo": zeros((L, 1, H)),
        "ln1_g": ones((L, 1, H)), "ln1_b": zeros((L, 1, H)),
        "w1": w1, "b1": zeros((L, 1, LANE)),
        "w2": w2, "b2": zeros((L, 1, H)),
        "ln2_g": ones((L, 1, H)), "ln2_b": zeros((L, 1, H)),
        # pooler + lane-padded classifier
        "pool_w": rnd((H, H)).astype(jnp.bfloat16), "pool_b": zeros((1, H)),
        "cls_w_pad": cls_w, "cls_b_pad": zeros((1, LANE)),
    }


# ----------------------------------------------------------------------------
# Forward pass (embedding gather is JAX glue; everything else is 1 kernel)
# ----------------------------------------------------------------------------

def text_only_sentiment_forward(params, input_ids, attention_mask, cfg):
    B, S = input_ids.shape
    H = cfg["hidden"]

    emb = (jnp.take(params["word_emb"], input_ids, axis=0)
           + params["pos_emb"][:S][None, :, :]
           + params["type_emb"][0][None, None, :])
    x_emb2d = emb.reshape(B * S, H).astype(jnp.float32)

    # additive attention mask, broadcast over query positions inside the kernel
    mask_add = ((1.0 - attention_mask.astype(jnp.float32))
                * jnp.float32(-1e9))[:, None, :]           # (B, 1, S)

    logits_pad = run_model(x_emb2d, mask_add, params, cfg)  # (B, 128)
    return logits_pad[:, :cfg["num_classes"]]


# pure-JAX f32 reference of the same math (for a loose correctness check)
def reference_forward(params, input_ids, attention_mask, cfg):
    B, S = input_ids.shape
    H, nh, L = cfg["hidden"], cfg["heads"], cfg["layers"]
    hd = H // nh
    scale = 1.0 / float(hd) ** 0.5
    f32 = jnp.float32

    def ln(x, g, b):
        m = jnp.mean(x, -1, keepdims=True)
        v = jnp.mean((x - m) ** 2, -1, keepdims=True)
        return (x - m) * lax.rsqrt(v + LN_EPS) * g + b

    def gelu(x):
        c = 0.7978845608028654
        return 0.5 * x * (1.0 + jnp.tanh(c * (x + 0.044715 * x ** 3)))

    emb = (jnp.take(params["word_emb"], input_ids, axis=0)
           + params["pos_emb"][:S][None] + params["type_emb"][0][None, None])
    x = ln(emb.reshape(B * S, H), params["emb_ln_g"], params["emb_ln_b"])
    mask = ((1.0 - attention_mask.astype(f32)) * -1e9)[:, None, :]
    for l in range(L):
        qkv = x @ params["wqkv"][l].astype(f32) + params["bqkv"][l]
        ctx = []
        for h in range(nh):
            q = qkv[:, h * hd:(h + 1) * hd].reshape(B, S, hd)
            k = qkv[:, H + h * hd:H + (h + 1) * hd].reshape(B, S, hd)
            v = qkv[:, 2 * H + h * hd:2 * H + (h + 1) * hd].reshape(B, S, hd)
            s = jnp.einsum("bqd,bkd->bqk", q, k) * scale + mask
            p = jax.nn.softmax(s, axis=-1)
            ctx.append(jnp.einsum("bqk,bkd->bqd", p, v).reshape(B * S, hd))
        attn = (jnp.concatenate(ctx, -1) @ params["wo"][l].astype(f32)
                + params["bo"][l])
        x = ln(attn + x, params["ln1_g"][l], params["ln1_b"][l])
        h1 = gelu(x @ params["w1"][l].astype(f32) + params["b1"][l])
        h2 = h1 @ params["w2"][l].astype(f32) + params["b2"][l]
        x = ln(h2 + x, params["ln2_g"][l], params["ln2_b"][l])
    cls = x.reshape(B, S, H)[:, 0, :]
    pooled = jnp.tanh(cls @ params["pool_w"].astype(f32) + params["pool_b"])
    logits = pooled @ params["cls_w_pad"].astype(f32) + params["cls_b_pad"]
    return logits[:, :cfg["num_classes"]]


@jax.jit
def _fwd(params, input_ids, attention_mask):
    return text_only_sentiment_forward(params, input_ids, attention_mask, CFG)


# ----------------------------------------------------------------------------

if __name__ == "__main__":
    key = jax.random.PRNGKey(0)
    k_param, k_ids = jax.random.split(key)
    params = init_params(k_param, CFG)

    B, S = 2, 8
    input_ids = jax.random.randint(k_ids, (B, S), 0, CFG["vocab"], dtype=jnp.int32)
    # second example padded in last 3 positions to exercise the mask path
    attention_mask = jnp.array([[1, 1, 1, 1, 1, 1, 1, 1],
                                [1, 1, 1, 1, 1, 0, 0, 0]], dtype=jnp.int32)

    logits = _fwd(params, input_ids, attention_mask)
    logits = jax.block_until_ready(logits)

    assert logits.shape == (B, CFG["num_classes"])
    assert bool(jnp.all(jnp.isfinite(logits)))

    # loose tolerance: kernel uses bf16 MXU matmuls + approximate reciprocal
    ref = reference_forward(params, input_ids, attention_mask, CFG)
    assert float(jnp.max(jnp.abs(logits - ref))) < 5e-2

    print("KERNEL_OK")
</pallas_src>

<mosaic_0001>
module attributes {stable_mosaic.version = 11 : i64} {
  func.func @_model_kernel(%arg0: memref<16x32xf32, #tpu.memory_space<vmem>>, %arg1: memref<2x1x8xf32, #tpu.memory_space<vmem>>, %arg2: memref<1x32xf32, #tpu.memory_space<vmem>>, %arg3: memref<1x32xf32, #tpu.memory_space<vmem>>, %arg4: memref<2x32x128xbf16, #tpu.memory_space<vmem>>, %arg5: memref<2x1x128xf32, #tpu.memory_space<vmem>>, %arg6: memref<2x32x32xbf16, #tpu.memory_space<vmem>>, %arg7: memref<2x1x32xf32, #tpu.memory_space<vmem>>, %arg8: memref<2x1x32xf32, #tpu.memory_space<vmem>>, %arg9: memref<2x1x32xf32, #tpu.memory_space<vmem>>, %arg10: memref<2x32x128xbf16, #tpu.memory_space<vmem>>, %arg11: memref<2x1x128xf32, #tpu.memory_space<vmem>>, %arg12: memref<2x128x32xbf16, #tpu.memory_space<vmem>>, %arg13: memref<2x1x32xf32, #tpu.memory_space<vmem>>, %arg14: memref<2x1x32xf32, #tpu.memory_space<vmem>>, %arg15: memref<2x1x32xf32, #tpu.memory_space<vmem>>, %arg16: memref<32x32xbf16, #tpu.memory_space<vmem>>, %arg17: memref<1x32xf32, #tpu.memory_space<vmem>>, %arg18: memref<32x128xbf16, #tpu.memory_space<vmem>>, %arg19: memref<1x128xf32, #tpu.memory_space<vmem>>, %arg20: memref<2x128xf32, #tpu.memory_space<vmem>>) attributes {dimension_semantics = [], scalar_prefetch = 0 : i64, scratch_operands = 0 : i64, tpu.core_type = #tpu.core_type<tc>} {
    %c0 = arith.constant 0 : index
    %c0_0 = arith.constant 0 : index
    %0 = vector.load %arg0[%c0, %c0_0] : memref<16x32xf32, #tpu.memory_space<vmem>>, vector<16x32xf32>
    %c0_1 = arith.constant 0 : index
    %c0_2 = arith.constant 0 : index
    %1 = vector.load %arg2[%c0_1, %c0_2] : memref<1x32xf32, #tpu.memory_space<vmem>>, vector<1x32xf32>
    %c0_3 = arith.constant 0 : index
    %c0_4 = arith.constant 0 : index
    %2 = vector.load %arg3[%c0_3, %c0_4] : memref<1x32xf32, #tpu.memory_space<vmem>>, vector<1x32xf32>
    %cst = arith.constant dense<0.000000e+00> : vector<16xf32>
    %3 = vector.multi_reduction <add>, %0, %cst [1] : vector<16x32xf32> to vector<16xf32>
    %4 = vector.shape_cast %3 : vector<16xf32> to vector<16x1xf32>
    %cst_5 = arith.constant 3.200000e+01 : f32
    %5 = vector.broadcast %cst_5 : f32 to vector<16x1xf32>
    %6 = arith.divf %4, %5 : vector<16x1xf32>
    %7 = vector.broadcast %6 : vector<16x1xf32> to vector<16x32xf32>
    %8 = arith.subf %0, %7 : vector<16x32xf32>
    %9 = arith.mulf %8, %8 : vector<16x32xf32>
    %cst_6 = arith.constant dense<0.000000e+00> : vector<16xf32>
    %10 = vector.multi_reduction <add>, %9, %cst_6 [1] : vector<16x32xf32> to vector<16xf32>
    %11 = vector.shape_cast %10 : vector<16xf32> to vector<16x1xf32>
    %cst_7 = arith.constant 3.200000e+01 : f32
    %12 = vector.broadcast %cst_7 : f32 to vector<16x1xf32>
    %13 = arith.divf %11, %12 : vector<16x1xf32>
    %14 = vector.broadcast %6 : vector<16x1xf32> to vector<16x32xf32>
    %15 = arith.subf %0, %14 : vector<16x32xf32>
    %cst_8 = arith.constant 9.99999996E-13 : f32
    %16 = vector.broadcast %cst_8 : f32 to vector<16x1xf32>
    %17 = arith.addf %13, %16 : vector<16x1xf32>
    %18 = math.rsqrt %17 : vector<16x1xf32>
    %19 = vector.broadcast %18 : vector<16x1xf32> to vector<16x32xf32>
    %20 = arith.mulf %15, %19 : vector<16x32xf32>
    %21 = vector.broadcast %1 : vector<1x32xf32> to vector<16x32xf32>
    %22 = arith.mulf %20, %21 : vector<16x32xf32>
    %23 = vector.broadcast %2 : vector<1x32xf32> to vector<16x32xf32>
    %24 = arith.addf %22, %23 : vector<16x32xf32>
    %c0_9 = arith.constant 0 : index
    %c0_10 = arith.constant 0 : index
    %c0_11 = arith.constant 0 : index
    %25 = vector.load %arg1[%c0_9, %c0_10, %c0_11] : memref<2x1x8xf32, #tpu.memory_space<vmem>>, vector<2x1x8xf32>
    %26 = arith.truncf %24 : vector<16x32xf32> to vector<16x32xbf16>
    %c0_12 = arith.constant 0 : index
    %c0_13 = arith.constant 0 : index
    %c0_14 = arith.constant 0 : index
    %27 = vector.load %arg4[%c0_12, %c0_13, %c0_14] : memref<2x32x128xbf16, #tpu.memory_space<vmem>>, vector<1x32x128xbf16>
    %28 = vector.shape_cast %27 : vector<1x32x128xbf16> to vector<32x128xbf16>
    %cst_15 = arith.constant dense<0.000000e+00> : vector<16x128xf32>
    %29 = tpu.matmul %26, %28, %cst_15 {dimension_numbers = #tpu.dot_dimension_numbers<[1], [0], [0], [1], [0, 0, 1, 1], [], []>} : vector<16x32xbf16>, vector<32x128xbf16>, vector<16x128xf32> -> vector<16x128xf32>
    %c0_16 = arith.constant 0 : index
    %c0_17 = arith.constant 0 : index
    %c0_18 = arith.constant 0 : index
    %30 = vector.load %arg5[%c0_16, %c0_17, %c0_18] : memref<2x1x128xf32, #tpu.memory_space<vmem>>, vector<1x1x128xf32>
    %31 = vector.shape_cast %30 : vector<1x1x128xf32> to vector<1x128xf32>
    %32 = vector.broadcast %31 : vector<1x128xf32> to vector<16x128xf32>
    %33 = arith.addf %29, %32 : vector<16x128xf32>
    %34 = arith.truncf %33 : vector<16x128xf32> to vector<16x128xbf16>
    %35 = vector.extract_strided_slice %34 {offsets = [0, 0], sizes = [16, 16], strides = [1, 1]} : vector<16x128xbf16> to vector<16x16xbf16>
    %36 = vector.shape_cast %35 : vector<16x16xbf16> to vector<2x8x16xbf16>
    %37 = vector.extract_strided_slice %34 {offsets = [0, 32], sizes = [16, 16], strides = [1, 1]} : vector<16x128xbf16> to vector<16x16xbf16>
    %38 = vector.shape_cast %37 : vector<16x16xbf16> to vector<2x8x16xbf16>
    %39 = vector.extract_strided_slice %34 {offsets = [0, 64], sizes = [16, 16], strides = [1, 1]} : vector<16x128xbf16> to vector<16x16xbf16>
    %40 = vector.shape_cast %39 : vector<16x16xbf16> to vector<2x8x16xbf16>
    "tpu.trace_start"() <{level = 10 : i32, message = "bqd,bkd->bqk"}> : () -> ()
    %cst_19 = arith.constant dense<0.000000e+00> : vector<2x8x8xf32>
    %41 = tpu.matmul %36, %38, %cst_19 {dimension_numbers = #tpu.dot_dimension_numbers<[2], [2], [1], [1], [0, 0, 0, 1, 1, 1], [0], [0]>} : vector<2x8x16xbf16>, vector<2x8x16xbf16>, vector<2x8x8xf32> -> vector<2x8x8xf32>
    "tpu.trace_stop"() : () -> ()
    %cst_20 = arith.constant 2.500000e-01 : f32
    %42 = vector.broadcast %cst_20 : f32 to vector<2x8x8xf32>
    %43 = arith.mulf %41, %42 : vector<2x8x8xf32>
    %44 = vector.broadcast %25 : vector<2x1x8xf32> to vector<2x8x8xf32>
    %45 = arith.addf %43, %44 : vector<2x8x8xf32>
    %cst_21 = arith.constant dense<0xFF800000> : vector<2x8xf32>
    %46 = vector.multi_reduction <maximumf>, %45, %cst_21 [2] : vector<2x8x8xf32> to vector<2x8xf32>
    %47 = vector.shape_cast %46 : vector<2x8xf32> to vector<2x8x1xf32>
    %48 = vector.broadcast %47 : vector<2x8x1xf32> to vector<2x8x8xf32>
    %49 = arith.subf %45, %48 : vector<2x8x8xf32>
    %50 = math.exp %49 : vector<2x8x8xf32>
    %cst_22 = arith.constant dense<0.000000e+00> : vector<2x8xf32>
    %51 = vector.multi_reduction <add>, %50, %cst_22 [2] : vector<2x8x8xf32> to vector<2x8xf32>
    %52 = vector.shape_cast %51 : vector<2x8xf32> to vector<2x8x1xf32>
    %53 = tpu.reciprocal %52 {approx = true} : vector<2x8x1xf32> -> vector<2x8x1xf32>
    %54 = vector.broadcast %53 : vector<2x8x1xf32> to vector<2x8x8xf32>
    %55 = arith.mulf %50, %54 : vector<2x8x8xf32>
    %56 = arith.truncf %55 : vector<2x8x8xf32> to vector<2x8x8xbf16>
    "tpu.trace_start"() <{level = 10 : i32, message = "bqk,bkd->bqd"}> : () -> ()
    %cst_23 = arith.constant dense<0.000000e+00> : vector<2x8x16xf32>
    %57 = tpu.matmul %56, %40, %cst_23 {dimension_numbers = #tpu.dot_dimension_numbers<[2], [1], [1], [2], [0, 0, 0, 1, 1, 2], [0], [0]>} : vector<2x8x8xbf16>, vector<2x8x16xbf16>, vector<2x8x16xf32> -> vector<2x8x16xf32>
    "tpu.trace_stop"() : () -> ()
    %58 = vector.shape_cast %57 : vector<2x8x16xf32> to vector<16x16xf32>
    %59 = vector.extract_strided_slice %34 {offsets = [0, 16], sizes = [16, 16], strides = [1, 1]} : vector<16x128xbf16> to vector<16x16xbf16>
    %60 = vector.shape_cast %59 : vector<16x16xbf16> to vector<2x8x16xbf16>
    %61 = vector.extract_strided_slice %34 {offsets = [0, 48], sizes = [16, 16], strides = [1, 1]} : vector<16x128xbf16> to vector<16x16xbf16>
    %62 = vector.shape_cast %61 : vector<16x16xbf16> to vector<2x8x16xbf16>
    %63 = vector.extract_strided_slice %34 {offsets = [0, 80], sizes = [16, 16], strides = [1, 1]} : vector<16x128xbf16> to vector<16x16xbf16>
    %64 = vector.shape_cast %63 : vector<16x16xbf16> to vector<2x8x16xbf16>
    "tpu.trace_start"() <{level = 10 : i32, message = "bqd,bkd->bqk"}> : () -> ()
    %cst_24 = arith.constant dense<0.000000e+00> : vector<2x8x8xf32>
    %65 = tpu.matmul %60, %62, %cst_24 {dimension_numbers = #tpu.dot_dimension_numbers<[2], [2], [1], [1], [0, 0, 0, 1, 1, 1], [0], [0]>} : vector<2x8x16xbf16>, vector<2x8x16xbf16>, vector<2x8x8xf32> -> vector<2x8x8xf32>
    "tpu.trace_stop"() : () -> ()
    %cst_25 = arith.constant 2.500000e-01 : f32
    %66 = vector.broadcast %cst_25 : f32 to vector<2x8x8xf32>
    %67 = arith.mulf %65, %66 : vector<2x8x8xf32>
    %68 = vector.broadcast %25 : vector<2x1x8xf32> to vector<2x8x8xf32>
    %69 = arith.addf %67, %68 : vector<2x8x8xf32>
    %cst_26 = arith.constant dense<0xFF800000> : vector<2x8xf32>
    %70 = vector.multi_reduction <maximumf>, %69, %cst_26 [2] : vector<2x8x8xf32> to vector<2x8xf32>
    %71 = vector.shape_cast %70 : vector<2x8xf32> to vector<2x8x1xf32>
    %72 = vector.broadcast %71 : vector<2x8x1xf32> to vector<2x8x8xf32>
    %73 = arith.subf %69, %72 : vector<2x8x8xf32>
    %74 = math.exp %73 : vector<2x8x8xf32>
    %cst_27 = arith.constant dense<0.000000e+00> : vector<2x8xf32>
    %75 = vector.multi_reduction <add>, %74, %cst_27 [2] : vector<2x8x8xf32> to vector<2x8xf32>
    %76 = vector.shape_cast %75 : vector<2x8xf32> to vector<2x8x1xf32>
    %77 = tpu.reciprocal %76 {approx = true} : vector<2x8x1xf32> -> vector<2x8x1xf32>
    %78 = vector.broadcast %77 : vector<2x8x1xf32> to vector<2x8x8xf32>
    %79 = arith.mulf %74, %78 : vector<2x8x8xf32>
    %80 = arith.truncf %79 : vector<2x8x8xf32> to vector<2x8x8xbf16>
    "tpu.trace_start"() <{level = 10 : i32, message = "bqk,bkd->bqd"}> : () -> ()
    %cst_28 = arith.constant dense<0.000000e+00> : vector<2x8x16xf32>
    %81 = tpu.matmul %80, %64, %cst_28 {dimension_numbers = #tpu.dot_dimension_numbers<[2], [1], [1], [2], [0, 0, 0, 1, 1, 2], [0], [0]>} : vector<2x8x8xbf16>, vector<2x8x16xbf16>, vector<2x8x16xf32> -> vector<2x8x16xf32>
    "tpu.trace_stop"() : () -> ()
    %82 = vector.shape_cast %81 : vector<2x8x16xf32> to vector<16x16xf32>
    %83 = tpu.concatenate %58, %82 in 1 : vector<16x16xf32>, vector<16x16xf32> -> vector<16x32xf32>
    %84 = arith.truncf %83 : vector<16x32xf32> to vector<16x32xbf16>
    %c0_29 = arith.constant 0 : index
    %c0_30 = arith.constant 0 : index
    %c0_31 = arith.constant 0 : index
    %85 = vector.load %arg6[%c0_29, %c0_30, %c0_31] : memref<2x32x32xbf16, #tpu.memory_space<vmem>>, vector<1x32x32xbf16>
    %86 = vector.shape_cast %85 : vector<1x32x32xbf16> to vector<32x32xbf16>
    %cst_32 = arith.constant dense<0.000000e+00> : vector<16x32xf32>
    %87 = tpu.matmul %84, %86, %cst_32 {dimension_numbers = #tpu.dot_dimension_numbers<[1], [0], [0], [1], [0, 0, 1, 1], [], []>} : vector<16x32xbf16>, vector<32x32xbf16>, vector<16x32xf32> -> vector<16x32xf32>
    %c0_33 = arith.constant 0 : index
    %c0_34 = arith.constant 0 : index
    %c0_35 = arith.constant 0 : index
    %88 = vector.load %arg7[%c0_33, %c0_34, %c0_35] : memref<2x1x32xf32, #tpu.memory_space<vmem>>, vector<1x1x32xf32>
    %89 = vector.shape_cast %88 : vector<1x1x32xf32> to vector<1x32xf32>
    %90 = vector.broadcast %89 : vector<1x32xf32> to vector<16x32xf32>
    %91 = arith.addf %87, %90 : vector<16x32xf32>
    %92 = arith.addf %91, %24 : vector<16x32xf32>
    %c0_36 = arith.constant 0 : index
    %c0_37 = arith.constant 0 : index
    %c0_38 = arith.constant 0 : index
    %93 = vector.load %arg8[%c0_36, %c0_37, %c0_38] : memref<2x1x32xf32, #tpu.memory_space<vmem>>, vector<1x1x32xf32>
    %94 = vector.shape_cast %93 : vector<1x1x32xf32> to vector<1x32xf32>
    %c0_39 = arith.constant 0 : index
    %c0_40 = arith.constant 0 : index
    %c0_41 = arith.constant 0 : index
    %95 = vector.load %arg9[%c0_39, %c0_40, %c0_41] : memref<2x1x32xf32, #tpu.memory_space<vmem>>, vector<1x1x32xf32>
    %96 = vector.shape_cast %95 : vector<1x1x32xf32> to vector<1x32xf32>
    %cst_42 = arith.constant dense<0.000000e+00> : vector<16xf32>
    %97 = vector.multi_reduction <add>, %92, %cst_42 [1] : vector<16x32xf32> to vector<16xf32>
    %98 = vector.shape_cast %97 : vector<16xf32> to vector<16x1xf32>
    %cst_43 = arith.constant 3.200000e+01 : f32
    %99 = vector.broadcast %cst_43 : f32 to vector<16x1xf32>
    %100 = arith.divf %98, %99 : vector<16x1xf32>
    %101 = vector.broadcast %100 : vector<16x1xf32> to vector<16x32xf32>
    %102 = arith.subf %92, %101 : vector<16x32xf32>
    %103 = arith.mulf %102, %102 : vector<16x32xf32>
    %cst_44 = arith.constant dense<0.000000e+00> : vector<16xf32>
    %104 = vector.multi_reduction <add>, %103, %cst_44 [1] : vector<16x32xf32> to vector<16xf32>
    %105 = vector.shape_cast %104 : vector<16xf32> to vector<16x1xf32>
    %cst_45 = arith.constant 3.200000e+01 : f32
    %106 = vector.broadcast %cst_45 : f32 to vector<16x1xf32>
    %107 = arith.divf %105, %106 : vector<16x1xf32>
    %108 = vector.broadcast %100 : vector<16x1xf32> to vector<16x32xf32>
    %109 = arith.subf %92, %108 : vector<16x32xf32>
    %cst_46 = arith.constant 9.99999996E-13 : f32
    %110 = vector.broadcast %cst_46 : f32 to vector<16x1xf32>
    %111 = arith.addf %107, %110 : vector<16x1xf32>
    %112 = math.rsqrt %111 : vector<16x1xf32>
    %113 = vector.broadcast %112 : vector<16x1xf32> to vector<16x32xf32>
    %114 = arith.mulf %109, %113 : vector<16x32xf32>
    %115 = vector.broadcast %94 : vector<1x32xf32> to vector<16x32xf32>
    %116 = arith.mulf %114, %115 : vector<16x32xf32>
    %117 = vector.broadcast %96 : vector<1x32xf32> to vector<16x32xf32>
    %118 = arith.addf %116, %117 : vector<16x32xf32>
    %119 = arith.truncf %118 : vector<16x32xf32> to vector<16x32xbf16>
    %c0_47 = arith.constant 0 : index
    %c0_48 = arith.constant 0 : index
    %c0_49 = arith.constant 0 : index
    %120 = vector.load %arg10[%c0_47, %c0_48, %c0_49] : memref<2x32x128xbf16, #tpu.memory_space<vmem>>, vector<1x32x128xbf16>
    %121 = vector.shape_cast %120 : vector<1x32x128xbf16> to vector<32x128xbf16>
    %cst_50 = arith.constant dense<0.000000e+00> : vector<16x128xf32>
    %122 = tpu.matmul %119, %121, %cst_50 {dimension_numbers = #tpu.dot_dimension_numbers<[1], [0], [0], [1], [0, 0, 1, 1], [], []>} : vector<16x32xbf16>, vector<32x128xbf16>, vector<16x128xf32> -> vector<16x128xf32>
    %c0_51 = arith.constant 0 : index
    %c0_52 = arith.constant 0 : index
    %c0_53 = arith.constant 0 : index
    %123 = vector.load %arg11[%c0_51, %c0_52, %c0_53] : memref<2x1x128xf32, #tpu.memory_space<vmem>>, vector<1x1x128xf32>
    %124 = vector.shape_cast %123 : vector<1x1x128xf32> to vector<1x128xf32>
    %125 = vector.broadcast %124 : vector<1x128xf32> to vector<16x128xf32>
    %126 = arith.addf %122, %125 : vector<16x128xf32>
    %cst_54 = arith.constant 5.000000e-01 : f32
    %127 = vector.broadcast %cst_54 : f32 to vector<16x128xf32>
    %128 = arith.mulf %127, %126 : vector<16x128xf32>
    %cst_55 = arith.constant 4.471500e-02 : f32
    %129 = vector.broadcast %cst_55 : f32 to vector<16x128xf32>
    %130 = arith.mulf %129, %126 : vector<16x128xf32>
    %131 = arith.mulf %130, %126 : vector<16x128xf32>
    %132 = arith.mulf %131, %126 : vector<16x128xf32>
    %133 = arith.addf %126, %132 : vector<16x128xf32>
    %cst_56 = arith.constant 0.797884583 : f32
    %134 = vector.broadcast %cst_56 : f32 to vector<16x128xf32>
    %135 = arith.mulf %134, %133 : vector<16x128xf32>
    %136 = math.tanh %135 : vector<16x128xf32>
    %cst_57 = arith.constant 1.000000e+00 : f32
    %137 = vector.broadcast %cst_57 : f32 to vector<16x128xf32>
    %138 = arith.addf %137, %136 : vector<16x128xf32>
    %139 = arith.mulf %128, %138 : vector<16x128xf32>
    %140 = arith.truncf %139 : vector<16x128xf32> to vector<16x128xbf16>
    %c0_58 = arith.constant 0 : index
    %c0_59 = arith.constant 0 : index
    %c0_60 = arith.constant 0 : index
    %141 = vector.load %arg12[%c0_58, %c0_59, %c0_60] : memref<2x128x32xbf16, #tpu.memory_space<vmem>>, vector<1x128x32xbf16>
    %142 = vector.shape_cast %141 : vector<1x128x32xbf16> to vector<128x32xbf16>
    %cst_61 = arith.constant dense<0.000000e+00> : vector<16x32xf32>
    %143 = tpu.matmul %140, %142, %cst_61 {dimension_numbers = #tpu.dot_dimension_numbers<[1], [0], [0], [1], [0, 0, 1, 1], [], []>} : vector<16x128xbf16>, vector<128x32xbf16>, vector<16x32xf32> -> vector<16x32xf32>
    %c0_62 = arith.constant 0 : index
    %c0_63 = arith.constant 0 : index
    %c0_64 = arith.constant 0 : index
    %144 = vector.load %arg13[%c0_62, %c0_63, %c0_64] : memref<2x1x32xf32, #tpu.memory_space<vmem>>, vector<1x1x32xf32>
    %145 = vector.shape_cast %144 : vector<1x1x32xf32> to vector<1x32xf32>
    %146 = vector.broadcast %145 : vector<1x32xf32> to vector<16x32xf32>
    %147 = arith.addf %143, %146 : vector<16x32xf32>
    %148 = arith.addf %147, %118 : vector<16x32xf32>
    %c0_65 = arith.constant 0 : index
    %c0_66 = arith.constant 0 : index
    %c0_67 = arith.constant 0 : index
    %149 = vector.load %arg14[%c0_65, %c0_66, %c0_67] : memref<2x1x32xf32, #tpu.memory_space<vmem>>, vector<1x1x32xf32>
    %150 = vector.shape_cast %149 : vector<1x1x32xf32> to vector<1x32xf32>
    %c0_68 = arith.constant 0 : index
    %c0_69 = arith.constant 0 : index
    %c0_70 = arith.constant 0 : index
    %151 = vector.load %arg15[%c0_68, %c0_69, %c0_70] : memref<2x1x32xf32, #tpu.memory_space<vmem>>, vector<1x1x32xf32>
    %152 = vector.shape_cast %151 : vector<1x1x32xf32> to vector<1x32xf32>
    %cst_71 = arith.constant dense<0.000000e+00> : vector<16xf32>
    %153 = vector.multi_reduction <add>, %148, %cst_71 [1] : vector<16x32xf32> to vector<16xf32>
    %154 = vector.shape_cast %153 : vector<16xf32> to vector<16x1xf32>
    %cst_72 = arith.constant 3.200000e+01 : f32
    %155 = vector.broadcast %cst_72 : f32 to vector<16x1xf32>
    %156 = arith.divf %154, %155 : vector<16x1xf32>
    %157 = vector.broadcast %156 : vector<16x1xf32> to vector<16x32xf32>
    %158 = arith.subf %148, %157 : vector<16x32xf32>
    %159 = arith.mulf %158, %158 : vector<16x32xf32>
    %cst_73 = arith.constant dense<0.000000e+00> : vector<16xf32>
    %160 = vector.multi_reduction <add>, %159, %cst_73 [1] : vector<16x32xf32> to vector<16xf32>
    %161 = vector.shape_cast %160 : vector<16xf32> to vector<16x1xf32>
    %cst_74 = arith.constant 3.200000e+01 : f32
    %162 = vector.broadcast %cst_74 : f32 to vector<16x1xf32>
    %163 = arith.divf %161, %162 : vector<16x1xf32>
    %164 = vector.broadcast %156 : vector<16x1xf32> to vector<16x32xf32>
    %165 = arith.subf %148, %164 : vector<16x32xf32>
    %cst_75 = arith.constant 9.99999996E-13 : f32
    %166 = vector.broadcast %cst_75 : f32 to vector<16x1xf32>
    %167 = arith.addf %163, %166 : vector<16x1xf32>
    %168 = math.rsqrt %167 : vector<16x1xf32>
    %169 = vector.broadcast %168 : vector<16x1xf32> to vector<16x32xf32>
    %170 = arith.mulf %165, %169 : vector<16x32xf32>
    %171 = vector.broadcast %150 : vector<1x32xf32> to vector<16x32xf32>
    %172 = arith.mulf %170, %171 : vector<16x32xf32>
    %173 = vector.broadcast %152 : vector<1x32xf32> to vector<16x32xf32>
    %174 = arith.addf %172, %173 : vector<16x32xf32>
    %175 = arith.truncf %174 : vector<16x32xf32> to vector<16x32xbf16>
    %c1 = arith.constant 1 : index
    %c0_76 = arith.constant 0 : index
    %c0_77 = arith.constant 0 : index
    %176 = vector.load %arg4[%c1, %c0_76, %c0_77] : memref<2x32x128xbf16, #tpu.memory_space<vmem>>, vector<1x32x128xbf16>
    %177 = vector.shape_cast %176 : vector<1x32x128xbf16> to vector<32x128xbf16>
    %cst_78 = arith.constant dense<0.000000e+00> : vector<16x128xf32>
    %178 = tpu.matmul %175, %177, %cst_78 {dimension_numbers = #tpu.dot_dimension_numbers<[1], [0], [0], [1], [0, 0, 1, 1], [], []>} : vector<16x32xbf16>, vector<32x128xbf16>, vector<16x128xf32> -> vector<16x128xf32>
    %c1_79 = arith.constant 1 : index
    %c0_80 = arith.constant 0 : index
    %c0_81 = arith.constant 0 : index
    %179 = vector.load %arg5[%c1_79, %c0_80, %c0_81] : memref<2x1x128xf32, #tpu.memory_space<vmem>>, vector<1x1x128xf32>
    %180 = vector.shape_cast %179 : vector<1x1x128xf32> to vector<1x128xf32>
    %181 = vector.broadcast %180 : vector<1x128xf32> to vector<16x128xf32>
    %182 = arith.addf %178, %181 : vector<16x128xf32>
    %183 = arith.truncf %182 : vector<16x128xf32> to vector<16x128xbf16>
    %184 = vector.extract_strided_slice %183 {offsets = [0, 0], sizes = [16, 16], strides = [1, 1]} : vector<16x128xbf16> to vector<16x16xbf16>
    %185 = vector.shape_cast %184 : vector<16x16xbf16> to vector<2x8x16xbf16>
    %186 = vector.extract_strided_slice %183 {offsets = [0, 32], sizes = [16, 16], strides = [1, 1]} : vector<16x128xbf16> to vector<16x16xbf16>
    %187 = vector.shape_cast %186 : vector<16x16xbf16> to vector<2x8x16xbf16>
    %188 = vector.extract_strided_slice %183 {offsets = [0, 64], sizes = [16, 16], strides = [1, 1]} : vector<16x128xbf16> to vector<16x16xbf16>
    %189 = vector.shape_cast %188 : vector<16x16xbf16> to vector<2x8x16xbf16>
    "tpu.trace_start"() <{level = 10 : i32, message = "bqd,bkd->bqk"}> : () -> ()
    %cst_82 = arith.constant dense<0.000000e+00> : vector<2x8x8xf32>
    %190 = tpu.matmul %185, %187, %cst_82 {dimension_numbers = #tpu.dot_dimension_numbers<[2], [2], [1], [1], [0, 0, 0, 1, 1, 1], [0], [0]>} : vector<2x8x16xbf16>, vector<2x8x16xbf16>, vector<2x8x8xf32> -> vector<2x8x8xf32>
    "tpu.trace_stop"() : () -> ()
    %cst_83 = arith.constant 2.500000e-01 : f32
    %191 = vector.broadcast %cst_83 : f32 to vector<2x8x8xf32>
    %192 = arith.mulf %190, %191 : vector<2x8x8xf32>
    %193 = vector.broadcast %25 : vector<2x1x8xf32> to vector<2x8x8xf32>
    %194 = arith.addf %192, %193 : vector<2x8x8xf32>
    %cst_84 = arith.constant dense<0xFF800000> : vector<2x8xf32>
    %195 = vector.multi_reduction <maximumf>, %194, %cst_84 [2] : vector<2x8x8xf32> to vector<2x8xf32>
    %196 = vector.shape_cast %195 : vector<2x8xf32> to vector<2x8x1xf32>
    %197 = vector.broadcast %196 : vector<2x8x1xf32> to vector<2x8x8xf32>
    %198 = arith.subf %194, %197 : vector<2x8x8xf32>
    %199 = math.exp %198 : vector<2x8x8xf32>
    %cst_85 = arith.constant dense<0.000000e+00> : vector<2x8xf32>
    %200 = vector.multi_reduction <add>, %199, %cst_85 [2] : vector<2x8x8xf32> to vector<2x8xf32>
    %201 = vector.shape_cast %200 : vector<2x8xf32> to vector<2x8x1xf32>
    %202 = tpu.reciprocal %201 {approx = true} : vector<2x8x1xf32> -> vector<2x8x1xf32>
    %203 = vector.broadcast %202 : vector<2x8x1xf32> to vector<2x8x8xf32>
    %204 = arith.mulf %199, %203 : vector<2x8x8xf32>
    %205 = arith.truncf %204 : vector<2x8x8xf32> to vector<2x8x8xbf16>
    "tpu.trace_start"() <{level = 10 : i32, message = "bqk,bkd->bqd"}> : () -> ()
    %cst_86 = arith.constant dense<0.000000e+00> : vector<2x8x16xf32>
    %206 = tpu.matmul %205, %189, %cst_86 {dimension_numbers = #tpu.dot_dimension_numbers<[2], [1], [1], [2], [0, 0, 0, 1, 1, 2], [0], [0]>} : vector<2x8x8xbf16>, vector<2x8x16xbf16>, vector<2x8x16xf32> -> vector<2x8x16xf32>
    "tpu.trace_stop"() : () -> ()
    %207 = vector.shape_cast %206 : vector<2x8x16xf32> to vector<16x16xf32>
    %208 = vector.extract_strided_slice %183 {offsets = [0, 16], sizes = [16, 16], strides = [1, 1]} : vector<16x128xbf16> to vector<16x16xbf16>
    %209 = vector.shape_cast %208 : vector<16x16xbf16> to vector<2x8x16xbf16>
    %210 = vector.extract_strided_slice %183 {offsets = [0, 48], sizes = [16, 16], strides = [1, 1]} : vector<16x128xbf16> to vector<16x16xbf16>
    %211 = vector.shape_cast %210 : vector<16x16xbf16> to vector<2x8x16xbf16>
    %212 = vector.extract_strided_slice %183 {offsets = [0, 80], sizes = [16, 16], strides = [1, 1]} : vector<16x128xbf16> to vector<16x16xbf16>
    %213 = vector.shape_cast %212 : vector<16x16xbf16> to vector<2x8x16xbf16>
    "tpu.trace_start"() <{level = 10 : i32, message = "bqd,bkd->bqk"}> : () -> ()
    %cst_87 = arith.constant dense<0.000000e+00> : vector<2x8x8xf32>
    %214 = tpu.matmul %209, %211, %cst_87 {dimension_numbers = #tpu.dot_dimension_numbers<[2], [2], [1], [1], [0, 0, 0, 1, 1, 1], [0], [0]>} : vector<2x8x16xbf16>, vector<2x8x16xbf16>, vector<2x8x8xf32> -> vector<2x8x8xf32>
    "tpu.trace_stop"() : () -> ()
    %cst_88 = arith.constant 2.500000e-01 : f32
    %215 = vector.broadcast %cst_88 : f32 to vector<2x8x8xf32>
    %216 = arith.mulf %214, %215 : vector<2x8x8xf32>
    %217 = vector.broadcast %25 : vector<2x1x8xf32> to vector<2x8x8xf32>
    %218 = arith.addf %216, %217 : vector<2x8x8xf32>
    %cst_89 = arith.constant dense<0xFF800000> : vector<2x8xf32>
    %219 = vector.multi_reduction <maximumf>, %218, %cst_89 [2] : vector<2x8x8xf32> to vector<2x8xf32>
    %220 = vector.shape_cast %219 : vector<2x8xf32> to vector<2x8x1xf32>
    %221 = vector.broadcast %220 : vector<2x8x1xf32> to vector<2x8x8xf32>
    %222 = arith.subf %218, %221 : vector<2x8x8xf32>
    %223 = math.exp %222 : vector<2x8x8xf32>
    %cst_90 = arith.constant dense<0.000000e+00> : vector<2x8xf32>
    %224 = vector.multi_reduction <add>, %223, %cst_90 [2] : vector<2x8x8xf32> to vector<2x8xf32>
    %225 = vector.shape_cast %224 : vector<2x8xf32> to vector<2x8x1xf32>
    %226 = tpu.reciprocal %225 {approx = true} : vector<2x8x1xf32> -> vector<2x8x1xf32>
    %227 = vector.broadcast %226 : vector<2x8x1xf32> to vector<2x8x8xf32>
    %228 = arith.mulf %223, %227 : vector<2x8x8xf32>
    %229 = arith.truncf %228 : vector<2x8x8xf32> to vector<2x8x8xbf16>
    "tpu.trace_start"() <{level = 10 : i32, message = "bqk,bkd->bqd"}> : () -> ()
    %cst_91 = arith.constant dense<0.000000e+00> : vector<2x8x16xf32>
    %230 = tpu.matmul %229, %213, %cst_91 {dimension_numbers = #tpu.dot_dimension_numbers<[2], [1], [1], [2], [0, 0, 0, 1, 1, 2], [0], [0]>} : vector<2x8x8xbf16>, vector<2x8x16xbf16>, vector<2x8x16xf32> -> vector<2x8x16xf32>
    "tpu.trace_stop"() : () -> ()
    %231 = vector.shape_cast %230 : vector<2x8x16xf32> to vector<16x16xf32>
    %232 = tpu.concatenate %207, %231 in 1 : vector<16x16xf32>, vector<16x16xf32> -> vector<16x32xf32>
    %233 = arith.truncf %232 : vector<16x32xf32> to vector<16x32xbf16>
    %c1_92 = arith.constant 1 : index
    %c0_93 = arith.constant 0 : index
    %c0_94 = arith.constant 0 : index
    %234 = vector.load %arg6[%c1_92, %c0_93, %c0_94] : memref<2x32x32xbf16, #tpu.memory_space<vmem>>, vector<1x32x32xbf16>
    %235 = vector.shape_cast %234 : vector<1x32x32xbf16> to vector<32x32xbf16>
    %cst_95 = arith.constant dense<0.000000e+00> : vector<16x32xf32>
    %236 = tpu.matmul %233, %235, %cst_95 {dimension_numbers = #tpu.dot_dimension_numbers<[1], [0], [0], [1], [0, 0, 1, 1], [], []>} : vector<16x32xbf16>, vector<32x32xbf16>, vector<16x32xf32> -> vector<16x32xf32>
    %c1_96 = arith.constant 1 : index
    %c0_97 = arith.constant 0 : index
    %c0_98 = arith.constant 0 : index
    %237 = vector.load %arg7[%c1_96, %c0_97, %c0_98] : memref<2x1x32xf32, #tpu.memory_space<vmem>>, vector<1x1x32xf32>
    %238 = vector.shape_cast %237 : vector<1x1x32xf32> to vector<1x32xf32>
    %239 = vector.broadcast %238 : vector<1x32xf32> to vector<16x32xf32>
    %240 = arith.addf %236, %239 : vector<16x32xf32>
    %241 = arith.addf %240, %174 : vector<16x32xf32>
    %c1_99 = arith.constant 1 : index
    %c0_100 = arith.constant 0 : index
    %c0_101 = arith.constant 0 : index
    %242 = vector.load %arg8[%c1_99, %c0_100, %c0_101] : memref<2x1x32xf32, #tpu.memory_space<vmem>>, vector<1x1x32xf32>
    %243 = vector.shape_cast %242 : vector<1x1x32xf32> to vector<1x32xf32>
    %c1_102 = arith.constant 1 : index
    %c0_103 = arith.constant 0 : index
    %c0_104 = arith.constant 0 : index
    %244 = vector.load %arg9[%c1_102, %c0_103, %c0_104] : memref<2x1x32xf32, #tpu.memory_space<vmem>>, vector<1x1x32xf32>
    %245 = vector.shape_cast %244 : vector<1x1x32xf32> to vector<1x32xf32>
    %cst_105 = arith.constant dense<0.000000e+00> : vector<16xf32>
    %246 = vector.multi_reduction <add>, %241, %cst_105 [1] : vector<16x32xf32> to vector<16xf32>
    %247 = vector.shape_cast %246 : vector<16xf32> to vector<16x1xf32>
    %cst_106 = arith.constant 3.200000e+01 : f32
    %248 = vector.broadcast %cst_106 : f32 to vector<16x1xf32>
    %249 = arith.divf %247, %248 : vector<16x1xf32>
    %250 = vector.broadcast %249 : vector<16x1xf32> to vector<16x32xf32>
    %251 = arith.subf %241, %250 : vector<16x32xf32>
    %252 = arith.mulf %251, %251 : vector<16x32xf32>
    %cst_107 = arith.constant dense<0.000000e+00> : vector<16xf32>
    %253 = vector.multi_reduction <add>, %252, %cst_107 [1] : vector<16x32xf32> to vector<16xf32>
    %254 = vector.shape_cast %253 : vector<16xf32> to vector<16x1xf32>
    %cst_108 = arith.constant 3.200000e+01 : f32
    %255 = vector.broadcast %cst_108 : f32 to vector<16x1xf32>
    %256 = arith.divf %254, %255 : vector<16x1xf32>
    %257 = vector.broadcast %249 : vector<16x1xf32> to vector<16x32xf32>
    %258 = arith.subf %241, %257 : vector<16x32xf32>
    %cst_109 = arith.constant 9.99999996E-13 : f32
    %259 = vector.broadcast %cst_109 : f32 to vector<16x1xf32>
    %260 = arith.addf %256, %259 : vector<16x1xf32>
    %261 = math.rsqrt %260 : vector<16x1xf32>
    %262 = vector.broadcast %261 : vector<16x1xf32> to vector<16x32xf32>
    %263 = arith.mulf %258, %262 : vector<16x32xf32>
    %264 = vector.broadcast %243 : vector<1x32xf32> to vector<16x32xf32>
    %265 = arith.mulf %263, %264 : vector<16x32xf32>
    %266 = vector.broadcast %245 : vector<1x32xf32> to vector<16x32xf32>
    %267 = arith.addf %265, %266 : vector<16x32xf32>
    %268 = arith.truncf %267 : vector<16x32xf32> to vector<16x32xbf16>
    %c1_110 = arith.constant 1 : index
    %c0_111 = arith.constant 0 : index
    %c0_112 = arith.constant 0 : index
    %269 = vector.load %arg10[%c1_110, %c0_111, %c0_112] : memref<2x32x128xbf16, #tpu.memory_space<vmem>>, vector<1x32x128xbf16>
    %270 = vector.shape_cast %269 : vector<1x32x128xbf16> to vector<32x128xbf16>
    %cst_113 = arith.constant dense<0.000000e+00> : vector<16x128xf32>
    %271 = tpu.matmul %268, %270, %cst_113 {dimension_numbers = #tpu.dot_dimension_numbers<[1], [0], [0], [1], [0, 0, 1, 1], [], []>} : vector<16x32xbf16>, vector<32x128xbf16>, vector<16x128xf32> -> vector<16x128xf32>
    %c1_114 = arith.constant 1 : index
    %c0_115 = arith.constant 0 : index
    %c0_116 = arith.constant 0 : index
    %272 = vector.load %arg11[%c1_114, %c0_115, %c0_116] : memref<2x1x128xf32, #tpu.memory_space<vmem>>, vector<1x1x128xf32>
    %273 = vector.shape_cast %272 : vector<1x1x128xf32> to vector<1x128xf32>
    %274 = vector.broadcast %273 : vector<1x128xf32> to vector<16x128xf32>
    %275 = arith.addf %271, %274 : vector<16x128xf32>
    %cst_117 = arith.constant 5.000000e-01 : f32
    %276 = vector.broadcast %cst_117 : f32 to vector<16x128xf32>
    %277 = arith.mulf %276, %275 : vector<16x128xf32>
    %cst_118 = arith.constant 4.471500e-02 : f32
    %278 = vector.broadcast %cst_118 : f32 to vector<16x128xf32>
    %279 = arith.mulf %278, %275 : vector<16x128xf32>
    %280 = arith.mulf %279, %275 : vector<16x128xf32>
    %281 = arith.mulf %280, %275 : vector<16x128xf32>
    %282 = arith.addf %275, %281 : vector<16x128xf32>
    %cst_119 = arith.constant 0.797884583 : f32
    %283 = vector.broadcast %cst_119 : f32 to vector<16x128xf32>
    %284 = arith.mulf %283, %282 : vector<16x128xf32>
    %285 = math.tanh %284 : vector<16x128xf32>
    %cst_120 = arith.constant 1.000000e+00 : f32
    %286 = vector.broadcast %cst_120 : f32 to vector<16x128xf32>
    %287 = arith.addf %286, %285 : vector<16x128xf32>
    %288 = arith.mulf %277, %287 : vector<16x128xf32>
    %289 = arith.truncf %288 : vector<16x128xf32> to vector<16x128xbf16>
    %c1_121 = arith.constant 1 : index
    %c0_122 = arith.constant 0 : index
    %c0_123 = arith.constant 0 : index
    %290 = vector.load %arg12[%c1_121, %c0_122, %c0_123] : memref<2x128x32xbf16, #tpu.memory_space<vmem>>, vector<1x128x32xbf16>
    %291 = vector.shape_cast %290 : vector<1x128x32xbf16> to vector<128x32xbf16>
    %cst_124 = arith.constant dense<0.000000e+00> : vector<16x32xf32>
    %292 = tpu.matmul %289, %291, %cst_124 {dimension_numbers = #tpu.dot_dimension_numbers<[1], [0], [0], [1], [0, 0, 1, 1], [], []>} : vector<16x128xbf16>, vector<128x32xbf16>, vector<16x32xf32> -> vector<16x32xf32>
    %c1_125 = arith.constant 1 : index
    %c0_126 = arith.constant 0 : index
    %c0_127 = arith.constant 0 : index
    %293 = vector.load %arg13[%c1_125, %c0_126, %c0_127] : memref<2x1x32xf32, #tpu.memory_space<vmem>>, vector<1x1x32xf32>
    %294 = vector.shape_cast %293 : vector<1x1x32xf32> to vector<1x32xf32>
    %295 = vector.broadcast %294 : vector<1x32xf32> to vector<16x32xf32>
    %296 = arith.addf %292, %295 : vector<16x32xf32>
    %297 = arith.addf %296, %267 : vector<16x32xf32>
    %c1_128 = arith.constant 1 : index
    %c0_129 = arith.constant 0 : index
    %c0_130 = arith.constant 0 : index
    %298 = vector.load %arg14[%c1_128, %c0_129, %c0_130] : memref<2x1x32xf32, #tpu.memory_space<vmem>>, vector<1x1x32xf32>
    %299 = vector.shape_cast %298 : vector<1x1x32xf32> to vector<1x32xf32>
    %c1_131 = arith.constant 1 : index
    %c0_132 = arith.constant 0 : index
    %c0_133 = arith.constant 0 : index
    %300 = vector.load %arg15[%c1_131, %c0_132, %c0_133] : memref<2x1x32xf32, #tpu.memory_space<vmem>>, vector<1x1x32xf32>
    %301 = vector.shape_cast %300 : vector<1x1x32xf32> to vector<1x32xf32>
    %cst_134 = arith.constant dense<0.000000e+00> : vector<16xf32>
    %302 = vector.multi_reduction <add>, %297, %cst_134 [1] : vector<16x32xf32> to vector<16xf32>
    %303 = vector.shape_cast %302 : vector<16xf32> to vector<16x1xf32>
    %cst_135 = arith.constant 3.200000e+01 : f32
    %304 = vector.broadcast %cst_135 : f32 to vector<16x1xf32>
    %305 = arith.divf %303, %304 : vector<16x1xf32>
    %306 = vector.broadcast %305 : vector<16x1xf32> to vector<16x32xf32>
    %307 = arith.subf %297, %306 : vector<16x32xf32>
    %308 = arith.mulf %307, %307 : vector<16x32xf32>
    %cst_136 = arith.constant dense<0.000000e+00> : vector<16xf32>
    %309 = vector.multi_reduction <add>, %308, %cst_136 [1] : vector<16x32xf32> to vector<16xf32>
    %310 = vector.shape_cast %309 : vector<16xf32> to vector<16x1xf32>
    %cst_137 = arith.constant 3.200000e+01 : f32
    %311 = vector.broadcast %cst_137 : f32 to vector<16x1xf32>
    %312 = arith.divf %310, %311 : vector<16x1xf32>
    %313 = vector.broadcast %305 : vector<16x1xf32> to vector<16x32xf32>
    %314 = arith.subf %297, %313 : vector<16x32xf32>
    %cst_138 = arith.constant 9.99999996E-13 : f32
    %315 = vector.broadcast %cst_138 : f32 to vector<16x1xf32>
    %316 = arith.addf %312, %315 : vector<16x1xf32>
    %317 = math.rsqrt %316 : vector<16x1xf32>
    %318 = vector.broadcast %317 : vector<16x1xf32> to vector<16x32xf32>
    %319 = arith.mulf %314, %318 : vector<16x32xf32>
    %320 = vector.broadcast %299 : vector<1x32xf32> to vector<16x32xf32>
    %321 = arith.mulf %319, %320 : vector<16x32xf32>
    %322 = vector.broadcast %301 : vector<1x32xf32> to vector<16x32xf32>
    %323 = arith.addf %321, %322 : vector<16x32xf32>
    %324 = vector.shape_cast %323 : vector<16x32xf32> to vector<2x8x32xf32>
    %325 = vector.extract_strided_slice %324 {offsets = [0, 0, 0], sizes = [2, 1, 32], strides = [1, 1, 1]} : vector<2x8x32xf32> to vector<2x1x32xf32>
    %326 = vector.shape_cast %325 : vector<2x1x32xf32> to vector<2x32xf32>
    %327 = arith.truncf %326 : vector<2x32xf32> to vector<2x32xbf16>
    %c0_139 = arith.constant 0 : index
    %c0_140 = arith.constant 0 : index
    %328 = vector.load %arg16[%c0_139, %c0_140] : memref<32x32xbf16, #tpu.memory_space<vmem>>, vector<32x32xbf16>
    %cst_141 = arith.constant dense<0.000000e+00> : vector<2x32xf32>
    %329 = tpu.matmul %327, %328, %cst_141 {dimension_numbers = #tpu.dot_dimension_numbers<[1], [0], [0], [1], [0, 0, 1, 1], [], []>} : vector<2x32xbf16>, vector<32x32xbf16>, vector<2x32xf32> -> vector<2x32xf32>
    %c0_142 = arith.constant 0 : index
    %c0_143 = arith.constant 0 : index
    %330 = vector.load %arg17[%c0_142, %c0_143] : memref<1x32xf32, #tpu.memory_space<vmem>>, vector<1x32xf32>
    %331 = vector.broadcast %330 : vector<1x32xf32> to vector<2x32xf32>
    %332 = arith.addf %329, %331 : vector<2x32xf32>
    %333 = math.tanh %332 : vector<2x32xf32>
    %334 = arith.truncf %333 : vector<2x32xf32> to vector<2x32xbf16>
    %c0_144 = arith.constant 0 : index
    %c0_145 = arith.constant 0 : index
    %335 = vector.load %arg18[%c0_144, %c0_145] : memref<32x128xbf16, #tpu.memory_space<vmem>>, vector<32x128xbf16>
    %cst_146 = arith.constant dense<0.000000e+00> : vector<2x128xf32>
    %336 = tpu.matmul %334, %335, %cst_146 {dimension_numbers = #tpu.dot_dimension_numbers<[1], [0], [0], [1], [0, 0, 1, 1], [], []>} : vector<2x32xbf16>, vector<32x128xbf16>, vector<2x128xf32> -> vector<2x128xf32>
    %c0_147 = arith.constant 0 : index
    %c0_148 = arith.constant 0 : index
    %337 = vector.load %arg19[%c0_147, %c0_148] : memref<1x128xf32, #tpu.memory_space<vmem>>, vector<1x128xf32>
    %338 = vector.broadcast %337 : vector<1x128xf32> to vector<2x128xf32>
    %339 = arith.addf %336, %338 : vector<2x128xf32>
    %c0_149 = arith.constant 0 : index
    %c0_150 = arith.constant 0 : index
    %340 = vector.load %arg20[%c0_149, %c0_150] : memref<2x128xf32, #tpu.memory_space<vmem>>, vector<2x128xf32>
    tpu.vector_store %arg20[%c0_149, %c0_150], %339 {strides = array<i32>} : memref<2x128xf32, #tpu.memory_space<vmem>>, vector<2x128xf32>,
    return
  }
}

</mosaic_0001>

<llo_original>
// kernel: _fwd.1
$region0: #{_fwd.1}
  #allocation0 [shape = 'u32[]', space=smem, size = 0x4, offset = 0x4, fixed_abs, tag = 'smem constant byte address 0x4 - core index']
  #allocation1 [shape = 'u32[144,128]{1,0:T(1,128)}', space=vmem, size = 0x12000, scoped, tag = 'internal scratch']
  %s0 = inlined_call_operand.vmem [shape: f32[16,32], index: 0, kind: input, shape index: {}]
  %s1 = inlined_call_operand.vmem [shape: f32[2,1,8], index: 1, kind: input, shape index: {}]
  %s2 = inlined_call_operand.vmem [shape: f32[1,32], index: 2, kind: input, shape index: {}]
  %s3 = inlined_call_operand.vmem [shape: f32[1,32], index: 3, kind: input, shape index: {}]
  %s4 = inlined_call_operand.vmem [shape: bf16[2,32,128], index: 4, kind: input, shape index: {}]
  %s5 = inlined_call_operand.vmem [shape: f32[2,1,128], index: 5, kind: input, shape index: {}]
  %s6 = inlined_call_operand.vmem [shape: bf16[2,32,32], index: 6, kind: input, shape index: {}]
  %s7 = inlined_call_operand.vmem [shape: f32[2,1,32], index: 7, kind: input, shape index: {}]
  %s8 = inlined_call_operand.vmem [shape: f32[2,1,32], index: 8, kind: input, shape index: {}]
  %s9 = inlined_call_operand.vmem [shape: f32[2,1,32], index: 9, kind: input, shape index: {}]
  %s10 = inlined_call_operand.vmem [shape: bf16[2,32,128], index: 10, kind: input, shape index: {}]
  %s11 = inlined_call_operand.vmem [shape: f32[2,1,128], index: 11, kind: input, shape index: {}]
  %s12 = inlined_call_operand.vmem [shape: bf16[2,128,32], index: 12, kind: input, shape index: {}]
  %s13 = inlined_call_operand.vmem [shape: f32[2,1,32], index: 13, kind: input, shape index: {}]
  %s14 = inlined_call_operand.vmem [shape: f32[2,1,32], index: 14, kind: input, shape index: {}]
  %s15 = inlined_call_operand.vmem [shape: f32[2,1,32], index: 15, kind: input, shape index: {}]
  %s16 = inlined_call_operand.vmem [shape: bf16[32,32], index: 16, kind: input, shape index: {}]
  %s17 = inlined_call_operand.vmem [shape: f32[1,32], index: 17, kind: input, shape index: {}]
  %s18 = inlined_call_operand.vmem [shape: bf16[32,128], index: 18, kind: input, shape index: {}]
  %s19 = inlined_call_operand.vmem [shape: f32[1,128], index: 19, kind: input, shape index: {}]
  %s20 = inlined_call_operand.hbm [shape: f32[2,128], index: 20, kind: output, shape index: {}]
  %s21 = sld [smem:[#allocation0]]
  $region90: #{_fwd.1} parent=0
    _
  %s23 = ssub.s32 1, %s21
  %s24 = scalar_select 0, %s23, %s21
  $region1: #{_fwd.1} parent=0
    #allocation2 [shape = 'u8[1024]{0}', space=vmem, size = 0x400, scoped, tag = 'output window, operand 0, single buffered']
    #allocation3 [shape = 's32[1]{0}', space=sflag, size = 0x4, scoped, tag = 'scoped memory for _fwd.1']
    %25 = vsyncpa [#allocation3], 0
    // Predicated region
    $region2: #{_fwd.1} parent=1 // pred_check
      _
    $region3: #{_fwd.1} parent=1 // pred_check_branch
      %27 = sbr.rel (0) target = $region5
    $region4: #{_fwd.1} parent=1 // pred_region
      _
    $region5: #{_fwd.1} parent=1 // pred_fallthru
      _
    // Predicated region
    $region6: #{_fwd.1} parent=1 // pred_check
      _
    $region7: #{_fwd.1} parent=1 // pred_check_branch
      %29 = sbr.rel (0) target = $region9
    $region8: #{_fwd.1} parent=1 // pred_region
      _
    $region9: #{_fwd.1} parent=1 // pred_fallthru
      _
    // Predicated region
    $region10: #{_fwd.1} parent=1 // pred_check
      _
    $region11: #{_fwd.1} parent=1 // pred_check_branch
      %31 = sbr.rel (0) target = $region13
    $region12: #{_fwd.1} parent=1 // pred_region
      _
    $region13: #{_fwd.1} parent=1 // pred_fallthru
      _
    // Predicated region
    $region14: #{_fwd.1} parent=1 // pred_check
      _
    $region15: #{_fwd.1} parent=1 // pred_check_branch
      %33 = sbr.rel (0) target = $region17
    $region16: #{_fwd.1} parent=1 // pred_region
      _
    $region17: #{_fwd.1} parent=1 // pred_fallthru
      _
    // Predicated region
    $region18: #{_fwd.1} parent=1 // pred_check
      _
    $region19: #{_fwd.1} parent=1 // pred_check_branch
      %35 = sbr.rel (0) target = $region21
    $region20: #{_fwd.1} parent=1 // pred_region
      _
    $region21: #{_fwd.1} parent=1 // pred_fallthru
      _
    // Predicated region
    $region22: #{_fwd.1} parent=1 // pred_check
      _
    $region23: #{_fwd.1} parent=1 // pred_check_branch
      %37 = sbr.rel (0) target = $region25
    $region24: #{_fwd.1} parent=1 // pred_region
      _
    $region25: #{_fwd.1} parent=1 // pred_fallthru
      _
    // Predicated region
    $region26: #{_fwd.1} parent=1 // pred_check
      _
    $region27: #{_fwd.1} parent=1 // pred_check_branch
      %39 = sbr.rel (0) target = $region29
    $region28: #{_fwd.1} parent=1 // pred_region
      _
    $region29: #{_fwd.1} parent=1 // pred_fallthru
      _
    // Predicated region
    $region30: #{_fwd.1} parent=1 // pred_check
      _
    $region31: #{_fwd.1} parent=1 // pred_check_branch
      %41 = sbr.rel (0) target = $region33
    $region32: #{_fwd.1} parent=1 // pred_region
      _
    $region33: #{_fwd.1} parent=1 // pred_fallthru
      _
    // Predicated region
    $region34: #{_fwd.1} parent=1 // pred_check
      _
    $region35: #{_fwd.1} parent=1 // pred_check_branch
      %43 = sbr.rel (0) target = $region37
    $region36: #{_fwd.1} parent=1 // pred_region
      _
    $region37: #{_fwd.1} parent=1 // pred_fallthru
      _
    // Predicated region
    $region38: #{_fwd.1} parent=1 // pred_check
      _
    $region39: #{_fwd.1} parent=1 // pred_check_branch
      %45 = sbr.rel (0) target = $region41
    $region40: #{_fwd.1} parent=1 // pred_region
      _
    $region41: #{_fwd.1} parent=1 // pred_fallthru
      _
    // Predicated region
    $region42: #{_fwd.1} parent=1 // pred_check
      _
    $region43: #{_fwd.1} parent=1 // pred_check_branch
      %47 = sbr.rel (0) target = $region45
    $region44: #{_fwd.1} parent=1 // pred_region
      _
    $region45: #{_fwd.1} parent=1 // pred_fallthru
      _
    // Predicated region
    $region46: #{_fwd.1} parent=1 // pred_check
      _
    $region47: #{_fwd.1} parent=1 // pred_check_branch
      %49 = sbr.rel (0) target = $region49
    $region48: #{_fwd.1} parent=1 // pred_region
      _
    $region49: #{_fwd.1} parent=1 // pred_fallthru
      _
    // Predicated region
    $region50: #{_fwd.1} parent=1 // pred_check
      _
    $region51: #{_fwd.1} parent=1 // pred_check_branch
      %51 = sbr.rel (0) target = $region53
    $region52: #{_fwd.1} parent=1 // pred_region
      _
    $region53: #{_fwd.1} parent=1 // pred_fallthru
      _
    // Predicated region
    $region54: #{_fwd.1} parent=1 // pred_check
      _
    $region55: #{_fwd.1} parent=1 // pred_check_branch
      %53 = sbr.rel (0) target = $region57
    $region56: #{_fwd.1} parent=1 // pred_region
      _
    $region57: #{_fwd.1} parent=1 // pred_fallthru
      _
    // Predicated region
    $region58: #{_fwd.1} parent=1 // pred_check
      _
    $region59: #{_fwd.1} parent=1 // pred_check_branch
      %55 = sbr.rel (0) target = $region61
    $region60: #{_fwd.1} parent=1 // pred_region
      _
    $region61: #{_fwd.1} parent=1 // pred_fallthru
      _
    // Predicated region
    $region62: #{_fwd.1} parent=1 // pred_check
      _
    $region63: #{_fwd.1} parent=1 // pred_check_branch
      %57 = sbr.rel (0) target = $region65
    $region64: #{_fwd.1} parent=1 // pred_region
      _
    $region65: #{_fwd.1} parent=1 // pred_fallthru
      _
    // Predicated region
    $region66: #{_fwd.1} parent=1 // pred_check
      _
    $region67: #{_fwd.1} parent=1 // pred_check_branch
      %59 = sbr.rel (0) target = $region69
    $region68: #{_fwd.1} parent=1 // pred_region
      _
    $region69: #{_fwd.1} parent=1 // pred_fallthru
      _
    // Predicated region
    $region70: #{_fwd.1} parent=1 // pred_check
      _
    $region71: #{_fwd.1} parent=1 // pred_check_branch
      %61 = sbr.rel (0) target = $region73
    $region72: #{_fwd.1} parent=1 // pred_region
      _
    $region73: #{_fwd.1} parent=1 // pred_fallthru
      _
    // Predicated region
    $region74: #{_fwd.1} parent=1 // pred_check
      _
    $region75: #{_fwd.1} parent=1 // pred_check_branch
      %63 = sbr.rel (0) target = $region77
    $region76: #{_fwd.1} parent=1 // pred_region
      _
    $region77: #{_fwd.1} parent=1 // pred_fallthru
      _
    // Predicated region
    $region78: #{_fwd.1} parent=1 // pred_check
      _
    $region79: #{_fwd.1} parent=1 // pred_check_branch
      %65 = sbr.rel (0) target = $region81
    $region80: #{_fwd.1} parent=1 // pred_region
      _
    $region81: #{_fwd.1} parent=1 // pred_fallthru
      _
    %v67 = vld [vmem:[%s0] sm:$0xff]
    %v68 = vld [vmem:[%s0 + $0x8] sm:$0xff]
    %v69 = vld [vmem:[%s2] sm:$0x1]
    %v70 = vld [vmem:[%s3] sm:$0x1]
    %vm71 = vcmask 261120
    %v72 = vsel %vm71, %v67, 0.0
    %73 = vadd.xlane.f32.xlu0 %v72
    %v74 = vpop.xlane.xlu0 %73
    %v75 = vsel %vm71, %v68, 0.0
    %76 = vadd.xlane.f32.xlu0 %v75
    %v77 = vpop.xlane.xlu0 %76
    %v78 = vrcp.pop 32.0
    %v79 = vmul.f32 %v74, %v78
    %v80 = vmul.f32 %v77, %v78
    %v81 = vsub.f32 %v67, %v79
    %v82 = vsub.f32 %v68, %v80
    %v83 = vmul.f32 %v81, %v81
    %v84 = vmul.f32 %v82, %v82
    %v85 = vsel %vm71, %v83, 0.0
    %86 = vadd.xlane.f32.xlu0 %v85
    %v87 = vpop.xlane.xlu0 %86
    %v88 = vsel %vm71, %v84, 0.0
    %89 = vadd.xlane.f32.xlu0 %v88
    %v90 = vpop.xlane.xlu0 %89
    %v91 = vmul.f32 %v87, %v78
    %v92 = vmul.f32 %v90, %v78
    %v93 = vadd.f32 %v91, 1e-12
    %v94 = vadd.f32 %v92, 1e-12
    %v95 = vrsqrt.pop %v93
    %v96 = vrsqrt.pop %v94
    %v97 = vmul.f32 %v81, %v95
    %v98 = vmul.f32 %v82, %v96
    %v100 = vlaneseq
    %v101 = vshrl.u32 %v100, 7
    %v102 = vsub.s32 0, %v101
    %v103 = vrot.slane %v69, %v102
    %v105 = vmul.f32 %v97, %v103
    %v106 = vmul.f32 %v98, %v103
    %v108 = vlaneseq
    %v109 = vshrl.u32 %v108, 7
    %v110 = vsub.s32 0, %v109
    %v111 = vrot.slane %v70, %v110
    %v113 = vadd.f32 %v105, %v111
    %v114 = vadd.f32 %v106, %v111
    %v115 = vld [vmem:[%s1] sm:$0x1]
    %v116 = vld [vmem:[%s1 + $0x1] sm:$0x1]
    %v117 = vpack.c.bf16 %v114, %v113
    %v118 = vld [vmem:[%s4] sm:$0xf]
    %v119 = vld [vmem:[%s4 + $0x4] sm:$0xf]
    %v120 = vld [vmem:[%s4 + $0x8] sm:$0xf]
    %v121 = vld [vmem:[%s4 + $0xc] sm:$0xf]
    %v122 = vld [vmem:[%s5] sm:$0x1]
    %v124 = vlaneseq
    %v125 = vshrl.u32 %v124, 7
    %v126 = vsub.s32 0, %v125
    %v127 = vrot.slane %v122, %v126
    %v133 = vunpack.c.l.b16 %v118
    %v134 = vunpack.c.l.b16 %v119
    %v135 = vunpack.c.l.b16 %v120
    %v136 = vunpack.c.l.b16 %v121
    %v137 = vpack.c.b16 %v134, %v133
    %v138 = vpack.c.b16 %v136, %v135
    %v142 = vsel %vm71, %v117, 0
    %144 = vmatprep.subr.bf16.mxu0 0
    %145 = vmatpush1.bf16.msra.mxu0 0
    %146 = vmatprep.subr.bf16.mxu0 0
    %147 = vmatpush1.bf16.msra.mxu0 0
    %148 = vmatprep.subr.bf16.mxu0 0
    %149 = vmatpush1.bf16.msra.mxu0 0
    %150 = vmatprep.subr.bf16.mxu0 0
    %151 = vmatpush1.bf16.msra.mxu0 0
    %152 = vmatprep.subr.bf16.mxu0 0
    %153 = vmatpush1.bf16.msra.mxu0 0
    %154 = vmatprep.subr.bf16.mxu0 0
    %155 = vmatpush1.bf16.msra.mxu0 0
    %156 = vmatprep.subr.bf16.mxu0 0
    %157 = vmatpush1.bf16.msra.mxu0 %v138
    %158 = vmatprep.subr.bf16.mxu0 0
    %159 = vmatpush1.bf16.msra.mxu0 %v137
    %160 = vmatprep.subr.bf16.mxu0 0
    %161 = vmatpush2.bf16.msra.mxu0 0
    %162 = vmatprep.subr.bf16.mxu0 0
    %163 = vmatpush2.bf16.msra.mxu0 0
    %164 = vmatprep.subr.bf16.mxu0 0
    %165 = vmatpush2.bf16.msra.mxu0 0
    %166 = vmatprep.subr.bf16.mxu0 0
    %167 = vmatpush2.bf16.msra.mxu0 0
    %168 = vmatprep.subr.bf16.mxu0 0
    %169 = vmatpush2.bf16.msra.mxu0 0
    %170 = vmatprep.subr.bf16.mxu0 0
    %171 = vmatpush2.bf16.msra.mxu0 0
    %172 = vmatprep.subr.bf16.mxu0 0
    %173 = vmatpush2.bf16.msra.mxu0 0
    %174 = vmatprep.subr.bf16.mxu0 0
    %175 = vmatpush2.bf16.msra.mxu0 0
    %176 = vmatprep.mubr.bf16.mxu0 0
    %177 = vmatmul.mubr.bf16.gmra.mxu0 %v142
    %v178 = vpop.f32.mrf.mxu0
    %v179 = vadd.f32 %v127, %v178
    %v180 = vpop.f32.mrf.mxu0
    %v181 = vpop.f32.mrf.mxu0
    %v182 = vadd.f32 %v127, %v181
    %v183 = vpop.f32.mrf.mxu0
    %184 = vdwg.mxu0
    %v185 = vpack.c.bf16 %v182, %v179
    %v187 = vunpack.c.l.b16 %v185
    %v188 = vunpack.c.h.b16 %v185
    %v189 = vpack.c.b16 %v187, %v187
    %v190 = vpack.c.b16 %v188, %v188
    %191 = vrot.lane.b32.xlu0 %v189, 96
    %v192 = vpop.permute.xlu0 %191
    %vm193 = vcmask 130048
    %v195 = vsel %vm193, %v189, 0
    %v198 = vsel %vm193, %v192, 0
    %200 = vmatprep.subr.bf16.mxu0 0
    %201 = vmatpush1.bf16.xpose.msra.mxu0 0
    %202 = vmatprep.subr.bf16.mxu0 0
    %203 = vmatpush1.bf16.xpose.msra.mxu0 0
    %204 = vmatprep.subr.bf16.mxu0 0
    %205 = vmatpush1.bf16.xpose.msra.mxu0 0
    %206 = vmatprep.subr.bf16.mxu0 0
    %207 = vmatpush1.bf16.xpose.msra.mxu0 0
    %208 = vmatprep.subr.bf16.mxu0 0
    %209 = vmatpush1.bf16.xpose.msra.mxu0 0
    %210 = vmatprep.subr.bf16.mxu0 0
    %211 = vmatpush1.bf16.xpose.msra.mxu0 0
    %212 = vmatprep.subr.bf16.mxu0 0
    %213 = vmatpush1.bf16.xpose.msra.mxu0 0
    %214 = vmatprep.subr.bf16.mxu0 0
    %215 = vmatpush1.bf16.xpose.msra.mxu0 %v198
    %216 = vmatprep.subr.bf16.mxu0 0
    %217 = vmatpush2.bf16.xpose.msra.mxu0 0
    %218 = vmatprep.subr.bf16.mxu0 0
    %219 = vmatpush2.bf16.xpose.msra.mxu0 0
    %220 = vmatprep.subr.bf16.mxu0 0
    %221 = vmatpush2.bf16.xpose.msra.mxu0 0
    %222 = vmatprep.subr.bf16.mxu0 0
    %223 = vmatpush2.bf16.xpose.msra.mxu0 0
    %224 = vmatprep.subr.bf16.mxu0 0
    %225 = vmatpush2.bf16.xpose.msra.mxu0 0
    %226 = vmatprep.subr.bf16.mxu0 0
    %227 = vmatpush2.bf16.xpose.msra.mxu0 0
    %228 = vmatprep.subr.bf16.mxu0 0
    %229 = vmatpush2.bf16.xpose.msra.mxu0 0
    %230 = vmatprep.subr.bf16.mxu0 0
    %231 = vmatpush2.bf16.xpose.msra.mxu0 0
    %232 = vmatprep.mubr.bf16.mxu0 0
    %233 = vmatmul.mubr.bf16.gmra.mxu0 %v195
    %v234 = vpop.f32.mrf.mxu0
    %v235 = vadd.f32 0.0, %v234
    %v236 = vpop.f32.mrf.mxu0
    %v237 = vpop.f32.mrf.mxu0
    %v238 = vpop.f32.mrf.mxu0
    %239 = vdwg.mxu0
    %240 = vrot.lane.b32.xlu0 %v190, 96
    %v241 = vpop.permute.xlu0 %240
    %v243 = vsel %vm193, %v190, 0
    %v246 = vsel %vm193, %v241, 0
    %248 = vmatprep.subr.bf16.mxu0 0
    %249 = vmatpush1.bf16.xpose.msra.mxu0 0
    %250 = vmatprep.subr.bf16.mxu0 0
    %251 = vmatpush1.bf16.xpose.msra.mxu0 0
    %252 = vmatprep.subr.bf16.mxu0 0
    %253 = vmatpush1.bf16.xpose.msra.mxu0 0
    %254 = vmatprep.subr.bf16.mxu0 0
    %255 = vmatpush1.bf16.xpose.msra.mxu0 0
    %256 = vmatprep.subr.bf16.mxu0 0
    %257 = vmatpush1.bf16.xpose.msra.mxu0 0
    %258 = vmatprep.subr.bf16.mxu0 0
    %259 = vmatpush1.bf16.xpose.msra.mxu0 0
    %260 = vmatprep.subr.bf16.mxu0 0
    %261 = vmatpush1.bf16.xpose.msra.mxu0 0
    %262 = vmatprep.subr.bf16.mxu0 0
    %263 = vmatpush1.bf16.xpose.msra.mxu0 %v246
    %264 = vmatprep.subr.bf16.mxu0 0
    %265 = vmatpush2.bf16.xpose.msra.mxu0 0
    %266 = vmatprep.subr.bf16.mxu0 0
    %267 = vmatpush2.bf16.xpose.msra.mxu0 0
    %268 = vmatprep.subr.bf16.mxu0 0
    %269 = vmatpush2.bf16.xpose.msra.mxu0 0
    %270 = vmatprep.subr.bf16.mxu0 0
    %271 = vmatpush2.bf16.xpose.msra.mxu0 0
    %272 = vmatprep.subr.bf16.mxu0 0
    %273 = vmatpush2.bf16.xpose.msra.mxu0 0
    %274 = vmatprep.subr.bf16.mxu0 0
    %275 = vmatpush2.bf16.xpose.msra.mxu0 0
    %276 = vmatprep.subr.bf16.mxu0 0
    %277 = vmatpush2.bf16.xpose.msra.mxu0 0
    %278 = vmatprep.subr.bf16.mxu0 0
    %279 = vmatpush2.bf16.xpose.msra.mxu0 0
    %280 = vmatprep.mubr.bf16.mxu0 0
    %281 = vmatmul.mubr.bf16.gmra.mxu0 %v243
    %v282 = vpop.f32.mrf.mxu0
    %v283 = vadd.f32 0.0, %v282
    %v284 = vpop.f32.mrf.mxu0
    %v285 = vpop.f32.mrf.mxu0
    %v286 = vpop.f32.mrf.mxu0
    %287 = vdwg.mxu0
    %v288 = vmul.f32 %v235, 0.25
    %v289 = vmul.f32 %v283, 0.25
    %v292 = vlaneseq
    %v293 = vshrl.u32 %v292, 7
    %v294 = vsub.s32 0, %v293
    %v295 = vrot.slane %v115, %v294
    %v296 = vlaneseq
    %v297 = vshrl.u32 %v296, 7
    %v298 = vsub.s32 0, %v297
    %v299 = vrot.slane %v116, %v298
    %v302 = vadd.f32 %v288, %v295
    %v303 = vadd.f32 %v289, %v299
    %vm304 = vcmask 64512
    %v305 = vsel %vm304, %v302, -inf
    %306 = vmax.xlane.f32.xlu0 %v305
    %v307 = vpop.xlane.xlu0 %306
    %v308 = vsel %vm304, %v303, -inf
    %309 = vmax.xlane.f32.xlu0 %v308
    %v310 = vpop.xlane.xlu0 %309
    %v311 = vsub.f32 %v302, %v307
    %v312 = vsub.f32 %v303, %v310
    %v313 = vmul.f32 %v311, 1.442695
    %v314 = vpow.pop %v313
    %v315 = vmul.f32 %v312, 1.442695
    %v316 = vpow.pop %v315
    %v317 = vsel %vm304, %v314, 0.0
    %318 = vadd.xlane.f32.xlu0 %v317
    %v319 = vpop.xlane.xlu0 %318
    %v320 = vsel %vm304, %v316, 0.0
    %321 = vadd.xlane.f32.xlu0 %v320
    %v322 = vpop.xlane.xlu0 %321
    %v323 = vrcp.pop %v319
    %v324 = vrcp.pop %v322
    %v325 = vmul.f32 %v314, %v323
    %v326 = vmul.f32 %v316, %v324
    %v327 = vpack.c.bf16 %v325, %v325
    %v328 = vpack.c.bf16 %v326, %v326
    %329 = vrot.lane.b32.xlu0 %v189, 64
    %v330 = vpop.permute.xlu0 %329
    %v332 = vsel %vm304, %v327, 0
    %vm334 = vcmask 1043456
    %v336 = vsel %vm334, %v330, 0
    %338 = vmatprep.subr.bf16.mxu0 0
    %339 = vmatpush1.bf16.msra.mxu0 0
    %340 = vmatprep.subr.bf16.mxu0 0
    %341 = vmatpush1.bf16.msra.mxu0 0
    %342 = vmatprep.subr.bf16.mxu0 0
    %343 = vmatpush1.bf16.msra.mxu0 0
    %344 = vmatprep.subr.bf16.mxu0 0
    %345 = vmatpush1.bf16.msra.mxu0 0
    %346 = vmatprep.subr.bf16.mxu0 0
    %347 = vmatpush1.bf16.msra.mxu0 0
    %348 = vmatprep.subr.bf16.mxu0 0
    %349 = vmatpush1.bf16.msra.mxu0 0
    %350 = vmatprep.subr.bf16.mxu0 0
    %351 = vmatpush1.bf16.msra.mxu0 0
    %352 = vmatprep.subr.bf16.mxu0 0
    %353 = vmatpush1.bf16.msra.mxu0 %v336
    %354 = vmatprep.subr.bf16.mxu0 0
    %355 = vmatpush2.bf16.msra.mxu0 0
    %356 = vmatprep.subr.bf16.mxu0 0
    %357 = vmatpush2.bf16.msra.mxu0 0
    %358 = vmatprep.subr.bf16.mxu0 0
    %359 = vmatpush2.bf16.msra.mxu0 0
    %360 = vmatprep.subr.bf16.mxu0 0
    %361 = vmatpush2.bf16.msra.mxu0 0
    %362 = vmatprep.subr.bf16.mxu0 0
    %363 = vmatpush2.bf16.msra.mxu0 0
    %364 = vmatprep.subr.bf16.mxu0 0
    %365 = vmatpush2.bf16.msra.mxu0 0
    %366 = vmatprep.subr.bf16.mxu0 0
    %367 = vmatpush2.bf16.msra.mxu0 0
    %368 = vmatprep.subr.bf16.mxu0 0
    %369 = vmatpush2.bf16.msra.mxu0 0
    %370 = vmatprep.mubr.bf16.mxu0 0
    %371 = vmatmul.mubr.bf16.gmra.mxu0 %v332
    %v372 = vpop.f32.mrf.mxu0
    %v373 = vadd.f32 0.0, %v372
    %v374 = vpop.f32.mrf.mxu0
    %v375 = vpop.f32.mrf.mxu0
    %v376 = vpop.f32.mrf.mxu0
    %377 = vdwg.mxu0
    %378 = vrot.lane.b32.xlu0 %v190, 64
    %v379 = vpop.permute.xlu0 %378
    %v381 = vsel %vm304, %v328, 0
    %v384 = vsel %vm334, %v379, 0
    %386 = vmatprep.subr.bf16.mxu0 0
    %387 = vmatpush1.bf16.msra.mxu0 0
    %388 = vmatprep.subr.bf16.mxu0 0
    %389 = vmatpush1.bf16.msra.mxu0 0
    %390 = vmatprep.subr.bf16.mxu0 0
    %391 = vmatpush1.bf16.msra.mxu0 0
    %392 = vmatprep.subr.bf16.mxu0 0
    %393 = vmatpush1.bf16.msra.mxu0 0
    %394 = vmatprep.subr.bf16.mxu0 0
    %395 = vmatpush1.bf16.msra.mxu0 0
    %396 = vmatprep.subr.bf16.mxu0 0
    %397 = vmatpush1.bf16.msra.mxu0 0
    %398 = vmatprep.subr.bf16.mxu0 0
    %399 = vmatpush1.bf16.msra.mxu0 0
    %400 = vmatprep.subr.bf16.mxu0 0
    %401 = vmatpush1.bf16.msra.mxu0 %v384
    %402 = vmatprep.subr.bf16.mxu0 0
    %403 = vmatpush2.bf16.msra.mxu0 0
    %404 = vmatprep.subr.bf16.mxu0 0
    %405 = vmatpush2.bf16.msra.mxu0 0
    %406 = vmatprep.subr.bf16.mxu0 0
    %407 = vmatpush2.bf16.msra.mxu0 0
    %408 = vmatprep.subr.bf16.mxu0 0
    %409 = vmatpush2.bf16.msra.mxu0 0
    %410 = vmatprep.subr.bf16.mxu0 0
    %411 = vmatpush2.bf16.msra.mxu0 0
    %412 = vmatprep.subr.bf16.mxu0 0
    %413 = vmatpush2.bf16.msra.mxu0 0
    %414 = vmatprep.subr.bf16.mxu0 0
    %415 = vmatpush2.bf16.msra.mxu0 0
    %416 = vmatprep.subr.bf16.mxu0 0
    %417 = vmatpush2.bf16.msra.mxu0 0
    %418 = vmatprep.mubr.bf16.mxu0 0
    %419 = vmatmul.mubr.bf16.gmra.mxu0 %v381
    %v420 = vpop.f32.mrf.mxu0
    %v421 = vadd.f32 0.0, %v420
    %v422 = vpop.f32.mrf.mxu0
    %v423 = vpop.f32.mrf.mxu0
    %v424 = vpop.f32.mrf.mxu0
    %425 = vdwg.mxu0
    %426 = vrot.lane.b32.xlu0 %v189, 112
    %v427 = vpop.permute.xlu0 %426
    %428 = vrot.lane.b32.xlu0 %v189, 80
    %v429 = vpop.permute.xlu0 %428
    %v431 = vsel %vm193, %v427, 0
    %v434 = vsel %vm193, %v429, 0
    %436 = vmatprep.subr.bf16.mxu0 0
    %437 = vmatpush1.bf16.xpose.msra.mxu0 0
    %438 = vmatprep.subr.bf16.mxu0 0
    %439 = vmatpush1.bf16.xpose.msra.mxu0 0
    %440 = vmatprep.subr.bf16.mxu0 0
    %441 = vmatpush1.bf16.xpose.msra.mxu0 0
    %442 = vmatprep.subr.bf16.mxu0 0
    %443 = vmatpush1.bf16.xpose.msra.mxu0 0
    %444 = vmatprep.subr.bf16.mxu0 0
    %445 = vmatpush1.bf16.xpose.msra.mxu0 0
    %446 = vmatprep.subr.bf16.mxu0 0
    %447 = vmatpush1.bf16.xpose.msra.mxu0 0
    %448 = vmatprep.subr.bf16.mxu0 0
    %449 = vmatpush1.bf16.xpose.msra.mxu0 0
    %450 = vmatprep.subr.bf16.mxu0 0
    %451 = vmatpush1.bf16.xpose.msra.mxu0 %v434
    %452 = vmatprep.subr.bf16.mxu0 0
    %453 = vmatpush2.bf16.xpose.msra.mxu0 0
    %454 = vmatprep.subr.bf16.mxu0 0
    %455 = vmatpush2.bf16.xpose.msra.mxu0 0
    %456 = vmatprep.subr.bf16.mxu0 0
    %457 = vmatpush2.bf16.xpose.msra.mxu0 0
    %458 = vmatprep.subr.bf16.mxu0 0
    %459 = vmatpush2.bf16.xpose.msra.mxu0 0
    %460 = vmatprep.subr.bf16.mxu0 0
    %461 = vmatpush2.bf16.xpose.msra.mxu0 0
    %462 = vmatprep.subr.bf16.mxu0 0
    %463 = vmatpush2.bf16.xpose.msra.mxu0 0
    %464 = vmatprep.subr.bf16.mxu0 0
    %465 = vmatpush2.bf16.xpose.msra.mxu0 0
    %466 = vmatprep.subr.bf16.mxu0 0
    %467 = vmatpush2.bf16.xpose.msra.mxu0 0
    %468 = vmatprep.mubr.bf16.mxu0 0
    %469 = vmatmul.mubr.bf16.gmra.mxu0 %v431
    %v470 = vpop.f32.mrf.mxu0
    %v471 = vadd.f32 0.0, %v470
    %v472 = vpop.f32.mrf.mxu0
    %v473 = vpop.f32.mrf.mxu0
    %v474 = vpop.f32.mrf.mxu0
    %475 = vdwg.mxu0
    %476 = vrot.lane.b32.xlu0 %v190, 112
    %v477 = vpop.permute.xlu0 %476
    %478 = vrot.lane.b32.xlu0 %v190, 80
    %v479 = vpop.permute.xlu0 %478
    %v481 = vsel %vm193, %v477, 0
    %v484 = vsel %vm193, %v479, 0
    %486 = vmatprep.subr.bf16.mxu0 0
    %487 = vmatpush1.bf16.xpose.msra.mxu0 0
    %488 = vmatprep.subr.bf16.mxu0 0
    %489 = vmatpush1.bf16.xpose.msra.mxu0 0
    %490 = vmatprep.subr.bf16.mxu0 0
    %491 = vmatpush1.bf16.xpose.msra.mxu0 0
    %492 = vmatprep.subr.bf16.mxu0 0
    %493 = vmatpush1.bf16.xpose.msra.mxu0 0
    %494 = vmatprep.subr.bf16.mxu0 0
    %495 = vmatpush1.bf16.xpose.msra.mxu0 0
    %496 = vmatprep.subr.bf16.mxu0 0
    %497 = vmatpush1.bf16.xpose.msra.mxu0 0
    %498 = vmatprep.subr.bf16.mxu0 0
    %499 = vmatpush1.bf16.xpose.msra.mxu0 0
    %500 = vmatprep.subr.bf16.mxu0 0
    %501 = vmatpush1.bf16.xpose.msra.mxu0 %v484
    %502 = vmatprep.subr.bf16.mxu0 0
    %503 = vmatpush2.bf16.xpose.msra.mxu0 0
    %504 = vmatprep.subr.bf16.mxu0 0
    %505 = vmatpush2.bf16.xpose.msra.mxu0 0
    %506 = vmatprep.subr.bf16.mxu0 0
    %507 = vmatpush2.bf16.xpose.msra.mxu0 0
    %508 = vmatprep.subr.bf16.mxu0 0
    %509 = vmatpush2.bf16.xpose.msra.mxu0 0
    %510 = vmatprep.subr.bf16.mxu0 0
    %511 = vmatpush2.bf16.xpose.msra.mxu0 0
    %512 = vmatprep.subr.bf16.mxu0 0
    %513 = vmatpush2.bf16.xpose.msra.mxu0 0
    %514 = vmatprep.subr.bf16.mxu0 0
    %515 = vmatpush2.bf16.xpose.msra.mxu0 0
    %516 = vmatprep.subr.bf16.mxu0 0
    %517 = vmatpush2.bf16.xpose.msra.mxu0 0
    %518 = vmatprep.mubr.bf16.mxu0 0
    %519 = vmatmul.mubr.bf16.gmra.mxu0 %v481
    %v520 = vpop.f32.mrf.mxu0
    %v521 = vadd.f32 0.0, %v520
    %v522 = vpop.f32.mrf.mxu0
    %v523 = vpop.f32.mrf.mxu0
    %v524 = vpop.f32.mrf.mxu0
    %525 = vdwg.mxu0
    %v526 = vmul.f32 %v471, 0.25
    %v527 = vmul.f32 %v521, 0.25
    %v528 = vadd.f32 %v526, %v295
    %v529 = vadd.f32 %v527, %v299
    %v530 = vsel %vm304, %v528, -inf
    %531 = vmax.xlane.f32.xlu0 %v530
    %v532 = vpop.xlane.xlu0 %531
    %v533 = vsel %vm304, %v529, -inf
    %534 = vmax.xlane.f32.xlu0 %v533
    %v535 = vpop.xlane.xlu0 %534
    %v536 = vsub.f32 %v528, %v532
    %v537 = vsub.f32 %v529, %v535
    %v538 = vmul.f32 %v536, 1.442695
    %v539 = vpow.pop %v538
    %v540 = vmul.f32 %v537, 1.442695
    %v541 = vpow.pop %v540
    %v542 = vsel %vm304, %v539, 0.0
    %543 = vadd.xlane.f32.xlu0 %v542
    %v544 = vpop.xlane.xlu0 %543
    %v545 = vsel %vm304, %v541, 0.0
    %546 = vadd.xlane.f32.xlu0 %v545
    %v547 = vpop.xlane.xlu0 %546
    %v548 = vrcp.pop %v544
    %v549 = vrcp.pop %v547
    %v550 = vmul.f32 %v539, %v548
    %v551 = vmul.f32 %v541, %v549
    %v552 = vpack.c.bf16 %v550, %v550
    %v553 = vpack.c.bf16 %v551, %v551
    %554 = vrot.lane.b32.xlu0 %v189, 48
    %v555 = vpop.permute.xlu0 %554
    %v557 = vsel %vm304, %v552, 0
    %v560 = vsel %vm334, %v555, 0
    %562 = vmatprep.subr.bf16.mxu0 0
    %563 = vmatpush1.bf16.msra.mxu0 0
    %564 = vmatprep.subr.bf16.mxu0 0
    %565 = vmatpush1.bf16.msra.mxu0 0
    %566 = vmatprep.subr.bf16.mxu0 0
    %567 = vmatpush1.bf16.msra.mxu0 0
    %568 = vmatprep.subr.bf16.mxu0 0
    %569 = vmatpush1.bf16.msra.mxu0 0
    %570 = vmatprep.subr.bf16.mxu0 0
    %571 = vmatpush1.bf16.msra.mxu0 0
    %572 = vmatprep.subr.bf16.mxu0 0
    %573 = vmatpush1.bf16.msra.mxu0 0
    %574 = vmatprep.subr.bf16.mxu0 0
    %575 = vmatpush1.bf16.msra.mxu0 0
    %576 = vmatprep.subr.bf16.mxu0 0
    %577 = vmatpush1.bf16.msra.mxu0 %v560
    %578 = vmatprep.subr.bf16.mxu0 0
    %579 = vmatpush2.bf16.msra.mxu0 0
    %580 = vmatprep.subr.bf16.mxu0 0
    %581 = vmatpush2.bf16.msra.mxu0 0
    %582 = vmatprep.subr.bf16.mxu0 0
    %583 = vmatpush2.bf16.msra.mxu0 0
    %584 = vmatprep.subr.bf16.mxu0 0
    %585 = vmatpush2.bf16.msra.mxu0 0
    %586 = vmatprep.subr.bf16.mxu0 0
    %587 = vmatpush2.bf16.msra.mxu0 0
    %588 = vmatprep.subr.bf16.mxu0 0
    %589 = vmatpush2.bf16.msra.mxu0 0
    %590 = vmatprep.subr.bf16.mxu0 0
    %591 = vmatpush2.bf16.msra.mxu0 0
    %592 = vmatprep.subr.bf16.mxu0 0
    %593 = vmatpush2.bf16.msra.mxu0 0
    %594 = vmatprep.mubr.bf16.mxu0 0
    %595 = vmatmul.mubr.bf16.gmra.mxu0 %v557
    %v596 = vpop.f32.mrf.mxu0
    %v597 = vadd.f32 0.0, %v596
    %v598 = vpop.f32.mrf.mxu0
    %v599 = vpop.f32.mrf.mxu0
    %v600 = vpop.f32.mrf.mxu0
    %601 = vdwg.mxu0
    %602 = vrot.lane.b32.xlu0 %v190, 48
    %v603 = vpop.permute.xlu0 %602
    %v605 = vsel %vm304, %v553, 0
    %v608 = vsel %vm334, %v603, 0
    %610 = vmatprep.subr.bf16.mxu0 0
    %611 = vmatpush1.bf16.msra.mxu0 0
    %612 = vmatprep.subr.bf16.mxu0 0
    %613 = vmatpush1.bf16.msra.mxu0 0
    %614 = vmatprep.subr.bf16.mxu0 0
    %615 = vmatpush1.bf16.msra.mxu0 0
    %616 = vmatprep.subr.bf16.mxu0 0
    %617 = vmatpush1.bf16.msra.mxu0 0
    %618 = vmatprep.subr.bf16.mxu0 0
    %619 = vmatpush1.bf16.msra.mxu0 0
    %620 = vmatprep.subr.bf16.mxu0 0
    %621 = vmatpush1.bf16.msra.mxu0 0
    %622 = vmatprep.subr.bf16.mxu0 0
    %623 = vmatpush1.bf16.msra.mxu0 0
    %624 = vmatprep.subr.bf16.mxu0 0
    %625 = vmatpush1.bf16.msra.mxu0 %v608
    %626 = vmatprep.subr.bf16.mxu0 0
    %627 = vmatpush2.bf16.msra.mxu0 0
    %628 = vmatprep.subr.bf16.mxu0 0
    %629 = vmatpush2.bf16.msra.mxu0 0
    %630 = vmatprep.subr.bf16.mxu0 0
    %631 = vmatpush2.bf16.msra.mxu0 0
    %632 = vmatprep.subr.bf16.mxu0 0
    %633 = vmatpush2.bf16.msra.mxu0 0
    %634 = vmatprep.subr.bf16.mxu0 0
    %635 = vmatpush2.bf16.msra.mxu0 0
    %636 = vmatprep.subr.bf16.mxu0 0
    %637 = vmatpush2.bf16.msra.mxu0 0
    %638 = vmatprep.subr.bf16.mxu0 0
    %639 = vmatpush2.bf16.msra.mxu0 0
    %640 = vmatprep.subr.bf16.mxu0 0
    %641 = vmatpush2.bf16.msra.mxu0 0
    %642 = vmatprep.mubr.bf16.mxu0 0
    %643 = vmatmul.mubr.bf16.gmra.mxu0 %v605
    %v644 = vpop.f32.mrf.mxu0
    %v645 = vadd.f32 0.0, %v644
    %v646 = vpop.f32.mrf.mxu0
    %v647 = vpop.f32.mrf.mxu0
    %v648 = vpop.f32.mrf.mxu0
    %649 = vdwg.mxu0
    %652 = vrot.lane.b32.xlu0 %v597, 16
    %v653 = vpop.permute.xlu0 %652
    %654 = vrot.lane.b32.xlu0 %v645, 16
    %v655 = vpop.permute.xlu0 %654
    %v658 = vsel %vm193, %v373, %v653
    %v659 = vsel %vm193, %v421, %v655
    %v660 = vpack.c.bf16 %v659, %v658
    %v661 = vld [vmem:[%s6] sm:$0xf]
    %v662 = vld [vmem:[%s6 + $0x4] sm:$0xf]
    %v663 = vld [vmem:[%s6 + $0x8] sm:$0xf]
    %v664 = vld [vmem:[%s6 + $0xc] sm:$0xf]
    %v665 = vld [vmem:[%s7] sm:$0x1]
    %v667 = vlaneseq
    %v668 = vshrl.u32 %v667, 7
    %v669 = vsub.s32 0, %v668
    %v670 = vrot.slane %v665, %v669
    %v676 = vunpack.c.l.b16 %v661
    %v677 = vunpack.c.l.b16 %v662
    %v678 = vunpack.c.l.b16 %v663
    %v679 = vunpack.c.l.b16 %v664
    %v680 = vpack.c.b16 %v677, %v676
    %v681 = vpack.c.b16 %v679, %v678
    %v685 = vsel %vm71, %v660, 0
    %687 = vmatprep.subr.bf16.mxu0 0
    %688 = vmatpush1.bf16.msra.mxu0 0
    %689 = vmatprep.subr.bf16.mxu0 0
    %690 = vmatpush1.bf16.msra.mxu0 0
    %691 = vmatprep.subr.bf16.mxu0 0
    %692 = vmatpush1.bf16.msra.mxu0 0
    %693 = vmatprep.subr.bf16.mxu0 0
    %694 = vmatpush1.bf16.msra.mxu0 0
    %695 = vmatprep.subr.bf16.mxu0 0
    %696 = vmatpush1.bf16.msra.mxu0 0
    %697 = vmatprep.subr.bf16.mxu0 0
    %698 = vmatpush1.bf16.msra.mxu0 0
    %699 = vmatprep.subr.bf16.mxu0 0
    %700 = vmatpush1.bf16.msra.mxu0 %v681
    %701 = vmatprep.subr.bf16.mxu0 0
    %702 = vmatpush1.bf16.msra.mxu0 %v680
    %703 = vmatprep.subr.bf16.mxu0 0
    %704 = vmatpush2.bf16.msra.mxu0 0
    %705 = vmatprep.subr.bf16.mxu0 0
    %706 = vmatpush2.bf16.msra.mxu0 0
    %707 = vmatprep.subr.bf16.mxu0 0
    %708 = vmatpush2.bf16.msra.mxu0 0
    %709 = vmatprep.subr.bf16.mxu0 0
    %710 = vmatpush2.bf16.msra.mxu0 0
    %711 = vmatprep.subr.bf16.mxu0 0
    %712 = vmatpush2.bf16.msra.mxu0 0
    %713 = vmatprep.subr.bf16.mxu0 0
    %714 = vmatpush2.bf16.msra.mxu0 0
    %715 = vmatprep.subr.bf16.mxu0 0
    %716 = vmatpush2.bf16.msra.mxu0 0
    %717 = vmatprep.subr.bf16.mxu0 0
    %718 = vmatpush2.bf16.msra.mxu0 0
    %719 = vmatprep.mubr.bf16.mxu0 0
    %720 = vmatmul.mubr.bf16.gmra.mxu0 %v685
    %v721 = vpop.f32.mrf.mxu0
    %v722 = vadd.f32 %v670, %v721
    %v723 = vpop.f32.mrf.mxu0
    %v724 = vpop.f32.mrf.mxu0
    %v725 = vadd.f32 %v670, %v724
    %v726 = vpop.f32.mrf.mxu0
    %727 = vdwg.mxu0
    %v728 = vadd.f32 %v722, %v113
    %v729 = vadd.f32 %v725, %v114
    %v730 = vld [vmem:[%s8] sm:$0x1]
    %v731 = vld [vmem:[%s9] sm:$0x1]
    %v732 = vsel %vm71, %v728, 0.0
    %733 = vadd.xlane.f32.xlu0 %v732
    %v734 = vpop.xlane.xlu0 %733
    %v735 = vsel %vm71, %v729, 0.0
    %736 = vadd.xlane.f32.xlu0 %v735
    %v737 = vpop.xlane.xlu0 %736
    %v738 = vmul.f32 %v734, %v78
    %v739 = vmul.f32 %v737, %v78
    %v740 = vsub.f32 %v728, %v738
    %v741 = vsub.f32 %v729, %v739
    %v742 = vmul.f32 %v740, %v740
    %v743 = vmul.f32 %v741, %v741
    %v744 = vsel %vm71, %v742, 0.0
    %745 = vadd.xlane.f32.xlu0 %v744
    %v746 = vpop.xlane.xlu0 %745
    %v747 = vsel %vm71, %v743, 0.0
    %748 = vadd.xlane.f32.xlu0 %v747
    %v749 = vpop.xlane.xlu0 %748
    %v750 = vmul.f32 %v746, %v78
    %v751 = vmul.f32 %v749, %v78
    %v752 = vadd.f32 %v750, 1e-12
    %v753 = vadd.f32 %v751, 1e-12
    %v754 = vrsqrt.pop %v752
    %v755 = vrsqrt.pop %v753
    %v756 = vmul.f32 %v740, %v754
    %v757 = vmul.f32 %v741, %v755
    %v759 = vlaneseq
    %v760 = vshrl.u32 %v759, 7
    %v761 = vsub.s32 0, %v760
    %v762 = vrot.slane %v730, %v761
    %v764 = vmul.f32 %v756, %v762
    %v765 = vmul.f32 %v757, %v762
    %v767 = vlaneseq
    %v768 = vshrl.u32 %v767, 7
    %v769 = vsub.s32 0, %v768
    %v770 = vrot.slane %v731, %v769
    %v772 = vadd.f32 %v764, %v770
    %v773 = vadd.f32 %v765, %v770
    %v774 = vpack.c.bf16 %v773, %v772
    %v775 = vld [vmem:[%s10] sm:$0xf]
    %v776 = vld [vmem:[%s10 + $0x4] sm:$0xf]
    %v777 = vld [vmem:[%s10 + $0x8] sm:$0xf]
    %v778 = vld [vmem:[%s10 + $0xc] sm:$0xf]
    %v779 = vld [vmem:[%s11] sm:$0x1]
    %v781 = vlaneseq
    %v782 = vshrl.u32 %v781, 7
    %v783 = vsub.s32 0, %v782
    %v784 = vrot.slane %v779, %v783
    %v790 = vunpack.c.l.b16 %v775
    %v791 = vunpack.c.l.b16 %v776
    %v792 = vunpack.c.l.b16 %v777
    %v793 = vunpack.c.l.b16 %v778
    %v794 = vpack.c.b16 %v791, %v790
    %v795 = vpack.c.b16 %v793, %v792
    %v799 = vsel %vm71, %v774, 0
    %801 = vmatprep.subr.bf16.mxu0 0
    %802 = vmatpush1.bf16.msra.mxu0 0
    %803 = vmatprep.subr.bf16.mxu0 0
    %804 = vmatpush1.bf16.msra.mxu0 0
    %805 = vmatprep.subr.bf16.mxu0 0
    %806 = vmatpush1.bf16.msra.mxu0 0
    %807 = vmatprep.subr.bf16.mxu0 0
    %808 = vmatpush1.bf16.msra.mxu0 0
    %809 = vmatprep.subr.bf16.mxu0 0
    %810 = vmatpush1.bf16.msra.mxu0 0
    %811 = vmatprep.subr.bf16.mxu0 0
    %812 = vmatpush1.bf16.msra.mxu0 0
    %813 = vmatprep.subr.bf16.mxu0 0
    %814 = vmatpush1.bf16.msra.mxu0 %v795
    %815 = vmatprep.subr.bf16.mxu0 0
    %816 = vmatpush1.bf16.msra.mxu0 %v794
    %817 = vmatprep.subr.bf16.mxu0 0
    %818 = vmatpush2.bf16.msra.mxu0 0
    %819 = vmatprep.subr.bf16.mxu0 0
    %820 = vmatpush2.bf16.msra.mxu0 0
    %821 = vmatprep.subr.bf16.mxu0 0
    %822 = vmatpush2.bf16.msra.mxu0 0
    %823 = vmatprep.subr.bf16.mxu0 0
    %824 = vmatpush2.bf16.msra.mxu0 0
    %825 = vmatprep.subr.bf16.mxu0 0
    %826 = vmatpush2.bf16.msra.mxu0 0
    %827 = vmatprep.subr.bf16.mxu0 0
    %828 = vmatpush2.bf16.msra.mxu0 0
    %829 = vmatprep.subr.bf16.mxu0 0
    %830 = vmatpush2.bf16.msra.mxu0 0
    %831 = vmatprep.subr.bf16.mxu0 0
    %832 = vmatpush2.bf16.msra.mxu0 0
    %833 = vmatprep.mubr.bf16.mxu0 0
    %834 = vmatmul.mubr.bf16.gmra.mxu0 %v799
    %v835 = vpop.f32.mrf.mxu0
    %v836 = vadd.f32 %v784, %v835
    %v837 = vpop.f32.mrf.mxu0
    %v838 = vpop.f32.mrf.mxu0
    %v839 = vadd.f32 %v784, %v838
    %v840 = vpop.f32.mrf.mxu0
    %841 = vdwg.mxu0
    %v842 = vmul.f32 %v836, 0.5
    %v843 = vmul.f32 %v839, 0.5
    %v844 = vmul.f32 %v836, 0.044715
    %v845 = vmul.f32 %v839, 0.044715
    %v846 = vmul.f32 %v844, %v836
    %v847 = vmul.f32 %v845, %v839
    %v848 = vmul.f32 %v846, %v836
    %v849 = vmul.f32 %v847, %v839
    %v850 = vadd.f32 %v836, %v848
    %v851 = vadd.f32 %v839, %v849
    %v852 = vmul.f32 %v850, 0.7978846
    %v853 = vmul.f32 %v851, 0.7978846
    %v854 = vtanh.pop %v852
    %v855 = vtanh.pop %v853
    %v856 = vadd.f32 %v854, 1.0
    %v857 = vadd.f32 %v855, 1.0
    %v858 = vmul.f32 %v842, %v856
    %v859 = vmul.f32 %v843, %v857
    %v860 = vpack.c.bf16 %v859, %v858
    %v861 = vld [vmem:[%s12] sm:$0xf]
    %v862 = vld [vmem:[%s12 + $0x4] sm:$0xf]
    %v863 = vld [vmem:[%s12 + $0x8] sm:$0xf]
    %v864 = vld [vmem:[%s12 + $0xc] sm:$0xf]
    %v865 = vld [vmem:[%s12 + $0x10] sm:$0xf]
    %v866 = vld [vmem:[%s12 + $0x14] sm:$0xf]
    %v867 = vld [vmem:[%s12 + $0x18] sm:$0xf]
    %v868 = vld [vmem:[%s12 + $0x1c] sm:$0xf]
    %v869 = vld [vmem:[%s12 + $0x20] sm:$0xf]
    %v870 = vld [vmem:[%s12 + $0x24] sm:$0xf]
    %v871 = vld [vmem:[%s12 + $0x28] sm:$0xf]
    %v872 = vld [vmem:[%s12 + $0x2c] sm:$0xf]
    %v873 = vld [vmem:[%s12 + $0x30] sm:$0xf]
    %v874 = vld [vmem:[%s12 + $0x34] sm:$0xf]
    %v875 = vld [vmem:[%s12 + $0x38] sm:$0xf]
    %v876 = vld [vmem:[%s12 + $0x3c] sm:$0xf]
    %v877 = vld [vmem:[%s13] sm:$0x1]
    %v879 = vlaneseq
    %v880 = vshrl.u32 %v879, 7
    %v881 = vsub.s32 0, %v880
    %v882 = vrot.slane %v877, %v881
    %v900 = vunpack.c.l.b16 %v861
    %v901 = vunpack.c.l.b16 %v862
    %v902 = vunpack.c.l.b16 %v863
    %v903 = vunpack.c.l.b16 %v864
    %v904 = vunpack.c.l.b16 %v865
    %v905 = vunpack.c.l.b16 %v866
    %v906 = vunpack.c.l.b16 %v867
    %v907 = vunpack.c.l.b16 %v868
    %v908 = vunpack.c.l.b16 %v869
    %v909 = vunpack.c.l.b16 %v870
    %v910 = vunpack.c.l.b16 %v871
    %v911 = vunpack.c.l.b16 %v872
    %v912 = vunpack.c.l.b16 %v873
    %v913 = vunpack.c.l.b16 %v874
    %v914 = vunpack.c.l.b16 %v875
    %v915 = vunpack.c.l.b16 %v876
    %v916 = vpack.c.b16 %v901, %v900
    %v917 = vpack.c.b16 %v903, %v902
    %v918 = vpack.c.b16 %v905, %v904
    %v919 = vpack.c.b16 %v907, %v906
    %v920 = vpack.c.b16 %v909, %v908
    %v921 = vpack.c.b16 %v911, %v910
    %v922 = vpack.c.b16 %v913, %v912
    %v923 = vpack.c.b16 %v915, %v914
    %932 = vmatprep.subr.bf16.mxu0 0
    %933 = vmatpush1.bf16.msra.mxu0 %v923
    %934 = vmatprep.subr.bf16.mxu0 0
    %935 = vmatpush1.bf16.msra.mxu0 %v922
    %936 = vmatprep.subr.bf16.mxu0 0
    %937 = vmatpush1.bf16.msra.mxu0 %v921
    %938 = vmatprep.subr.bf16.mxu0 0
    %939 = vmatpush1.bf16.msra.mxu0 %v920
    %940 = vmatprep.subr.bf16.mxu0 0
    %941 = vmatpush1.bf16.msra.mxu0 %v919
    %942 = vmatprep.subr.bf16.mxu0 0
    %943 = vmatpush1.bf16.msra.mxu0 %v918
    %944 = vmatprep.subr.bf16.mxu0 0
    %945 = vmatpush1.bf16.msra.mxu0 %v917
    %946 = vmatprep.subr.bf16.mxu0 0
    %947 = vmatpush1.bf16.msra.mxu0 %v916
    %948 = vmatprep.subr.bf16.mxu0 0
    %949 = vmatpush2.bf16.msra.mxu0 0
    %950 = vmatprep.subr.bf16.mxu0 0
    %951 = vmatpush2.bf16.msra.mxu0 0
    %952 = vmatprep.subr.bf16.mxu0 0
    %953 = vmatpush2.bf16.msra.mxu0 0
    %954 = vmatprep.subr.bf16.mxu0 0
    %955 = vmatpush2.bf16.msra.mxu0 0
    %956 = vmatprep.subr.bf16.mxu0 0
    %957 = vmatpush2.bf16.msra.mxu0 0
    %958 = vmatprep.subr.bf16.mxu0 0
    %959 = vmatpush2.bf16.msra.mxu0 0
    %960 = vmatprep.subr.bf16.mxu0 0
    %961 = vmatpush2.bf16.msra.mxu0 0
    %962 = vmatprep.subr.bf16.mxu0 0
    %963 = vmatpush2.bf16.msra.mxu0 0
    %964 = vmatprep.mubr.bf16.mxu0 0
    %965 = vmatmul.mubr.bf16.gmra.mxu0 %v860
    %v966 = vpop.f32.mrf.mxu0
    %v967 = vadd.f32 %v882, %v966
    %v968 = vpop.f32.mrf.mxu0
    %v969 = vpop.f32.mrf.mxu0
    %v970 = vadd.f32 %v882, %v969
    %v971 = vpop.f32.mrf.mxu0
    %972 = vdwg.mxu0
    %v973 = vadd.f32 %v967, %v772
    %v974 = vadd.f32 %v970, %v773
    %v975 = vld [vmem:[%s14] sm:$0x1]
    %v976 = vld [vmem:[%s15] sm:$0x1]
    %v977 = vsel %vm71, %v973, 0.0
    %978 = vadd.xlane.f32.xlu0 %v977
    %v979 = vpop.xlane.xlu0 %978
    %v980 = vsel %vm71, %v974, 0.0
    %981 = vadd.xlane.f32.xlu0 %v980
    %v982 = vpop.xlane.xlu0 %981
    %v983 = vmul.f32 %v979, %v78
    %v984 = vmul.f32 %v982, %v78
    %v985 = vsub.f32 %v973, %v983
    %v986 = vsub.f32 %v974, %v984
    %v987 = vmul.f32 %v985, %v985
    %v988 = vmul.f32 %v986, %v986
    %v989 = vsel %vm71, %v987, 0.0
    %990 = vadd.xlane.f32.xlu0 %v989
    %v991 = vpop.xlane.xlu0 %990
    %v992 = vsel %vm71, %v988, 0.0
    %993 = vadd.xlane.f32.xlu0 %v992
    %v994 = vpop.xlane.xlu0 %993
    %v995 = vmul.f32 %v991, %v78
    %v996 = vmul.f32 %v994, %v78
    %v997 = vadd.f32 %v995, 1e-12
    %v998 = vadd.f32 %v996, 1e-12
    %v999 = vrsqrt.pop %v997
    %v1000 = vrsqrt.pop %v998
    %v1001 = vmul.f32 %v985, %v999
    %v1002 = vmul.f32 %v986, %v1000
    %v1004 = vlaneseq
    %v1005 = vshrl.u32 %v1004, 7
    %v1006 = vsub.s32 0, %v1005
    %v1007 = vrot.slane %v975, %v1006
    %v1009 = vmul.f32 %v1001, %v1007
    %v1010 = vmul.f32 %v1002, %v1007
    %v1012 = vlaneseq
    %v1013 = vshrl.u32 %v1012, 7
    %v1014 = vsub.s32 0, %v1013
    %v1015 = vrot.slane %v976, %v1014
    %v1017 = vadd.f32 %v1009, %v1015
    %v1018 = vadd.f32 %v1010, %v1015
    %v1019 = vpack.c.bf16 %v1018, %v1017
    %s1020 = scalar_lea.vmem %s4, 16
    %v1021 = vld [vmem:[%s1020] sm:$0xf]
    %v1022 = vld [vmem:[%s1020 + $0x4] sm:$0xf]
    %v1023 = vld [vmem:[%s1020 + $0x8] sm:$0xf]
    %v1024 = vld [vmem:[%s1020 + $0xc] sm:$0xf]
    %s1025 = scalar_lea.vmem %s5, 1
    %v1026 = vld [vmem:[%s1025] sm:$0x1]
    %v1028 = vlaneseq
    %v1029 = vshrl.u32 %v1028, 7
    %v1030 = vsub.s32 0, %v1029
    %v1031 = vrot.slane %v1026, %v1030
    %v1037 = vunpack.c.l.b16 %v1021
    %v1038 = vunpack.c.l.b16 %v1022
    %v1039 = vunpack.c.l.b16 %v1023
    %v1040 = vunpack.c.l.b16 %v1024
    %v1041 = vpack.c.b16 %v1038, %v1037
    %v1042 = vpack.c.b16 %v1040, %v1039
    %v1046 = vsel %vm71, %v1019, 0
    %1048 = vmatprep.subr.bf16.mxu0 0
    %1049 = vmatpush1.bf16.msra.mxu0 0
    %1050 = vmatprep.subr.bf16.mxu0 0
    %1051 = vmatpush1.bf16.msra.mxu0 0
    %1052 = vmatprep.subr.bf16.mxu0 0
    %1053 = vmatpush1.bf16.msra.mxu0 0
    %1054 = vmatprep.subr.bf16.mxu0 0
    %1055 = vmatpush1.bf16.msra.mxu0 0
    %1056 = vmatprep.subr.bf16.mxu0 0
    %1057 = vmatpush1.bf16.msra.mxu0 0
    %1058 = vmatprep.subr.bf16.mxu0 0
    %1059 = vmatpush1.bf16.msra.mxu0 0
    %1060 = vmatprep.subr.bf16.mxu0 0
    %1061 = vmatpush1.bf16.msra.mxu0 %v1042
    %1062 = vmatprep.subr.bf16.mxu0 0
    %1063 = vmatpush1.bf16.msra.mxu0 %v1041
    %1064 = vmatprep.subr.bf16.mxu0 0
    %1065 = vmatpush2.bf16.msra.mxu0 0
    %1066 = vmatprep.subr.bf16.mxu0 0
    %1067 = vmatpush2.bf16.msra.mxu0 0
    %1068 = vmatprep.subr.bf16.mxu0 0
    %1069 = vmatpush2.bf16.msra.mxu0 0
    %1070 = vmatprep.subr.bf16.mxu0 0
    %1071 = vmatpush2.bf16.msra.mxu0 0
    %1072 = vmatprep.subr.bf16.mxu0 0
    %1073 = vmatpush2.bf16.msra.mxu0 0
    %1074 = vmatprep.subr.bf16.mxu0 0
    %1075 = vmatpush2.bf16.msra.mxu0 0
    %1076 = vmatprep.subr.bf16.mxu0 0
    %1077 = vmatpush2.bf16.msra.mxu0 0
    %1078 = vmatprep.subr.bf16.mxu0 0
    %1079 = vmatpush2.bf16.msra.mxu0 0
    %1080 = vmatprep.mubr.bf16.mxu0 0
    %1081 = vmatmul.mubr.bf16.gmra.mxu0 %v1046
    %v1082 = vpop.f32.mrf.mxu0
    %v1083 = vadd.f32 %v1031, %v1082
    %v1084 = vpop.f32.mrf.mxu0
    %v1085 = vpop.f32.mrf.mxu0
    %v1086 = vadd.f32 %v1031, %v1085
    %v1087 = vpop.f32.mrf.mxu0
    %1088 = vdwg.mxu0
    %v1089 = vpack.c.bf16 %v1086, %v1083
    %v1091 = vunpack.c.l.b16 %v1089
    %v1092 = vunpack.c.h.b16 %v1089
    %v1093 = vpack.c.b16 %v1091, %v1091
    %v1094 = vpack.c.b16 %v1092, %v1092
    %1095 = vrot.lane.b32.xlu0 %v1093, 96
    %v1096 = vpop.permute.xlu0 %1095
    %v1098 = vsel %vm193, %v1093, 0
    %v1101 = vsel %vm193, %v1096, 0
    %1103 = vmatprep.subr.bf16.mxu0 0
    %1104 = vmatpush1.bf16.xpose.msra.mxu0 0
    %1105 = vmatprep.subr.bf16.mxu0 0
    %1106 = vmatpush1.bf16.xpose.msra.mxu0 0
    %1107 = vmatprep.subr.bf16.mxu0 0
    %1108 = vmatpush1.bf16.xpose.msra.mxu0 0
    %1109 = vmatprep.subr.bf16.mxu0 0
    %1110 = vmatpush1.bf16.xpose.msra.mxu0 0
    %1111 = vmatprep.subr.bf16.mxu0 0
    %1112 = vmatpush1.bf16.xpose.msra.mxu0 0
    %1113 = vmatprep.subr.bf16.mxu0 0
    %1114 = vmatpush1.bf16.xpose.msra.mxu0 0
    %1115 = vmatprep.subr.bf16.mxu0 0
    %1116 = vmatpush1.bf16.xpose.msra.mxu0 0
    %1117 = vmatprep.subr.bf16.mxu0 0
    %1118 = vmatpush1.bf16.xpose.msra.mxu0 %v1101
    %1119 = vmatprep.subr.bf16.mxu0 0
    %1120 = vmatpush2.bf16.xpose.msra.mxu0 0
    %1121 = vmatprep.subr.bf16.mxu0 0
    %1122 = vmatpush2.bf16.xpose.msra.mxu0 0
    %1123 = vmatprep.subr.bf16.mxu0 0
    %1124 = vmatpush2.bf16.xpose.msra.mxu0 0
    %1125 = vmatprep.subr.bf16.mxu0 0
    %1126 = vmatpush2.bf16.xpose.msra.mxu0 0
    %1127 = vmatprep.subr.bf16.mxu0 0
    %1128 = vmatpush2.bf16.xpose.msra.mxu0 0
    %1129 = vmatprep.subr.bf16.mxu0 0
    %1130 = vmatpush2.bf16.xpose.msra.mxu0 0
    %1131 = vmatprep.subr.bf16.mxu0 0
    %1132 = vmatpush2.bf16.xpose.msra.mxu0 0
    %1133 = vmatprep.subr.bf16.mxu0 0
    %1134 = vmatpush2.bf16.xpose.msra.mxu0 0
    %1135 = vmatprep.mubr.bf16.mxu0 0
    %1136 = vmatmul.mubr.bf16.gmra.mxu0 %v1098
    %v1137 = vpop.f32.mrf.mxu0
    %v1138 = vadd.f32 0.0, %v1137
    %v1139 = vpop.f32.mrf.mxu0
    %v1140 = vpop.f32.mrf.mxu0
    %v1141 = vpop.f32.mrf.mxu0
    %1142 = vdwg.mxu0
    %1143 = vrot.lane.b32.xlu0 %v1094, 96
    %v1144 = vpop.permute.xlu0 %1143
    %v1146 = vsel %vm193, %v1094, 0
    %v1149 = vsel %vm193, %v1144, 0
    %1151 = vmatprep.subr.bf16.mxu0 0
    %1152 = vmatpush1.bf16.xpose.msra.mxu0 0
    %1153 = vmatprep.subr.bf16.mxu0 0
    %1154 = vmatpush1.bf16.xpose.msra.mxu0 0
    %1155 = vmatprep.subr.bf16.mxu0 0
    %1156 = vmatpush1.bf16.xpose.msra.mxu0 0
    %1157 = vmatprep.subr.bf16.mxu0 0
    %1158 = vmatpush1.bf16.xpose.msra.mxu0 0
    %1159 = vmatprep.subr.bf16.mxu0 0
    %1160 = vmatpush1.bf16.xpose.msra.mxu0 0
    %1161 = vmatprep.subr.bf16.mxu0 0
    %1162 = vmatpush1.bf16.xpose.msra.mxu0 0
    %1163 = vmatprep.subr.bf16.mxu0 0
    %1164 = vmatpush1.bf16.xpose.msra.mxu0 0
    %1165 = vmatprep.subr.bf16.mxu0 0
    %1166 = vmatpush1.bf16.xpose.msra.mxu0 %v1149
    %1167 = vmatprep.subr.bf16.mxu0 0
    %1168 = vmatpush2.bf16.xpose.msra.mxu0 0
    %1169 = vmatprep.subr.bf16.mxu0 0
    %1170 = vmatpush2.bf16.xpose.msra.mxu0 0
    %1171 = vmatprep.subr.bf16.mxu0 0
    %1172 = vmatpush2.bf16.xpose.msra.mxu0 0
    %1173 = vmatprep.subr.bf16.mxu0 0
    %1174 = vmatpush2.bf16.xpose.msra.mxu0 0
    %1175 = vmatprep.subr.bf16.mxu0 0
    %1176 = vmatpush2.bf16.xpose.msra.mxu0 0
    %1177 = vmatprep.subr.bf16.mxu0 0
    %1178 = vmatpush2.bf16.xpose.msra.mxu0 0
    %1179 = vmatprep.subr.bf16.mxu0 0
    %1180 = vmatpush2.bf16.xpose.msra.mxu0 0
    %1181 = vmatprep.subr.bf16.mxu0 0
    %1182 = vmatpush2.bf16.xpose.msra.mxu0 0
    %1183 = vmatprep.mubr.bf16.mxu0 0
    %1184 = vmatmul.mubr.bf16.gmra.mxu0 %v1146
    %v1185 = vpop.f32.mrf.mxu0
    %v1186 = vadd.f32 0.0, %v1185
    %v1187 = vpop.f32.mrf.mxu0
    %v1188 = vpop.f32.mrf.mxu0
    %v1189 = vpop.f32.mrf.mxu0
    %1190 = vdwg.mxu0
    %v1191 = vmul.f32 %v1138, 0.25
    %v1192 = vmul.f32 %v1186, 0.25
    %v1193 = vadd.f32 %v1191, %v295
    %v1194 = vadd.f32 %v1192, %v299
    %v1195 = vsel %vm304, %v1193, -inf
    %1196 = vmax.xlane.f32.xlu0 %v1195
    %v1197 = vpop.xlane.xlu0 %1196
    %v1198 = vsel %vm304, %v1194, -inf
    %1199 = vmax.xlane.f32.xlu0 %v1198
    %v1200 = vpop.xlane.xlu0 %1199
    %v1201 = vsub.f32 %v1193, %v1197
    %v1202 = vsub.f32 %v1194, %v1200
    %v1203 = vmul.f32 %v1201, 1.442695
    %v1204 = vpow.pop %v1203
    %v1205 = vmul.f32 %v1202, 1.442695
    %v1206 = vpow.pop %v1205
    %v1207 = vsel %vm304, %v1204, 0.0
    %1208 = vadd.xlane.f32.xlu0 %v1207
    %v1209 = vpop.xlane.xlu0 %1208
    %v1210 = vsel %vm304, %v1206, 0.0
    %1211 = vadd.xlane.f32.xlu0 %v1210
    %v1212 = vpop.xlane.xlu0 %1211
    %v1213 = vrcp.pop %v1209
    %v1214 = vrcp.pop %v1212
    %v1215 = vmul.f32 %v1204, %v1213
    %v1216 = vmul.f32 %v1206, %v1214
    %v1217 = vpack.c.bf16 %v1215, %v1215
    %v1218 = vpack.c.bf16 %v1216, %v1216
    %1219 = vrot.lane.b32.xlu0 %v1093, 64
    %v1220 = vpop.permute.xlu0 %1219
    %v1222 = vsel %vm304, %v1217, 0
    %v1225 = vsel %vm334, %v1220, 0
    %1227 = vmatprep.subr.bf16.mxu0 0
    %1228 = vmatpush1.bf16.msra.mxu0 0
    %1229 = vmatprep.subr.bf16.mxu0 0
    %1230 = vmatpush1.bf16.msra.mxu0 0
    %1231 = vmatprep.subr.bf16.mxu0 0
    %1232 = vmatpush1.bf16.msra.mxu0 0
    %1233 = vmatprep.subr.bf16.mxu0 0
    %1234 = vmatpush1.bf16.msra.mxu0 0
    %1235 = vmatprep.subr.bf16.mxu0 0
    %1236 = vmatpush1.bf16.msra.mxu0 0
    %1237 = vmatprep.subr.bf16.mxu0 0
    %1238 = vmatpush1.bf16.msra.mxu0 0
    %1239 = vmatprep.subr.bf16.mxu0 0
    %1240 = vmatpush1.bf16.msra.mxu0 0
    %1241 = vmatprep.subr.bf16.mxu0 0
    %1242 = vmatpush1.bf16.msra.mxu0 %v1225
    %1243 = vmatprep.subr.bf16.mxu0 0
    %1244 = vmatpush2.bf16.msra.mxu0 0
    %1245 = vmatprep.subr.bf16.mxu0 0
    %1246 = vmatpush2.bf16.msra.mxu0 0
    %1247 = vmatprep.subr.bf16.mxu0 0
    %1248 = vmatpush2.bf16.msra.mxu0 0
    %1249 = vmatprep.subr.bf16.mxu0 0
    %1250 = vmatpush2.bf16.msra.mxu0 0
    %1251 = vmatprep.subr.bf16.mxu0 0
    %1252 = vmatpush2.bf16.msra.mxu0 0
    %1253 = vmatprep.subr.bf16.mxu0 0
    %1254 = vmatpush2.bf16.msra.mxu0 0
    %1255 = vmatprep.subr.bf16.mxu0 0
    %1256 = vmatpush2.bf16.msra.mxu0 0
    %1257 = vmatprep.subr.bf16.mxu0 0
    %1258 = vmatpush2.bf16.msra.mxu0 0
    %1259 = vmatprep.mubr.bf16.mxu0 0
    %1260 = vmatmul.mubr.bf16.gmra.mxu0 %v1222
    %v1261 = vpop.f32.mrf.mxu0
    %v1262 = vadd.f32 0.0, %v1261
    %v1263 = vpop.f32.mrf.mxu0
    %v1264 = vpop.f32.mrf.mxu0
    %v1265 = vpop.f32.mrf.mxu0
    %1266 = vdwg.mxu0
    %1267 = vrot.lane.b32.xlu0 %v1094, 64
    %v1268 = vpop.permute.xlu0 %1267
    %v1270 = vsel %vm304, %v1218, 0
    %v1273 = vsel %vm334, %v1268, 0
    %1275 = vmatprep.subr.bf16.mxu0 0
    %1276 = vmatpush1.bf16.msra.mxu0 0
    %1277 = vmatprep.subr.bf16.mxu0 0
    %1278 = vmatpush1.bf16.msra.mxu0 0
    %1279 = vmatprep.subr.bf16.mxu0 0
    %1280 = vmatpush1.bf16.msra.mxu0 0
    %1281 = vmatprep.subr.bf16.mxu0 0
    %1282 = vmatpush1.bf16.msra.mxu0 0
    %1283 = vmatprep.subr.bf16.mxu0 0
    %1284 = vmatpush1.bf16.msra.mxu0 0
    %1285 = vmatprep.subr.bf16.mxu0 0
    %1286 = vmatpush1.bf16.msra.mxu0 0
    %1287 = vmatprep.subr.bf16.mxu0 0
    %1288 = vmatpush1.bf16.msra.mxu0 0
    %1289 = vmatprep.subr.bf16.mxu0 0
    %1290 = vmatpush1.bf16.msra.mxu0 %v1273
    %1291 = vmatprep.subr.bf16.mxu0 0
    %1292 = vmatpush2.bf16.msra.mxu0 0
    %1293 = vmatprep.subr.bf16.mxu0 0
    %1294 = vmatpush2.bf16.msra.mxu0 0
    %1295 = vmatprep.subr.bf16.mxu0 0
    %1296 = vmatpush2.bf16.msra.mxu0 0
    %1297 = vmatprep.subr.bf16.mxu0 0
    %1298 = vmatpush2.bf16.msra.mxu0 0
    %1299 = vmatprep.subr.bf16.mxu0 0
    %1300 = vmatpush2.bf16.msra.mxu0 0
    %1301 = vmatprep.subr.bf16.mxu0 0
    %1302 = vmatpush2.bf16.msra.mxu0 0
    %1303 = vmatprep.subr.bf16.mxu0 0
    %1304 = vmatpush2.bf16.msra.mxu0 0
    %1305 = vmatprep.subr.bf16.mxu0 0
    %1306 = vmatpush2.bf16.msra.mxu0 0
    %1307 = vmatprep.mubr.bf16.mxu0 0
    %1308 = vmatmul.mubr.bf16.gmra.mxu0 %v1270
    %v1309 = vpop.f32.mrf.mxu0
    %v1310 = vadd.f32 0.0, %v1309
    %v1311 = vpop.f32.mrf.mxu0
    %v1312 = vpop.f32.mrf.mxu0
    %v1313 = vpop.f32.mrf.mxu0
    %1314 = vdwg.mxu0
    %1315 = vrot.lane.b32.xlu0 %v1093, 112
    %v1316 = vpop.permute.xlu0 %1315
    %1317 = vrot.lane.b32.xlu0 %v1093, 80
    %v1318 = vpop.permute.xlu0 %1317
    %v1320 = vsel %vm193, %v1316, 0
    %v1323 = vsel %vm193, %v1318, 0
    %1325 = vmatprep.subr.bf16.mxu0 0
    %1326 = vmatpush1.bf16.xpose.msra.mxu0 0
    %1327 = vmatprep.subr.bf16.mxu0 0
    %1328 = vmatpush1.bf16.xpose.msra.mxu0 0
    %1329 = vmatprep.subr.bf16.mxu0 0
    %1330 = vmatpush1.bf16.xpose.msra.mxu0 0
    %1331 = vmatprep.subr.bf16.mxu0 0
    %1332 = vmatpush1.bf16.xpose.msra.mxu0 0
    %1333 = vmatprep.subr.bf16.mxu0 0
    %1334 = vmatpush1.bf16.xpose.msra.mxu0 0
    %1335 = vmatprep.subr.bf16.mxu0 0
    %1336 = vmatpush1.bf16.xpose.msra.mxu0 0
    %1337 = vmatprep.subr.bf16.mxu0 0
    %1338 = vmatpush1.bf16.xpose.msra.mxu0 0
    %1339 = vmatprep.subr.bf16.mxu0 0
    %1340 = vmatpush1.bf16.xpose.msra.mxu0 %v1323
    %1341 = vmatprep.subr.bf16.mxu0 0
    %1342 = vmatpush2.bf16.xpose.msra.mxu0 0
    %1343 = vmatprep.subr.bf16.mxu0 0
    %1344 = vmatpush2.bf16.xpose.msra.mxu0 0
    %1345 = vmatprep.subr.bf16.mxu0 0
    %1346 = vmatpush2.bf16.xpose.msra.mxu0 0
    %1347 = vmatprep.subr.bf16.mxu0 0
    %1348 = vmatpush2.bf16.xpose.msra.mxu0 0
    %1349 = vmatprep.subr.bf16.mxu0 0
    %1350 = vmatpush2.bf16.xpose.msra.mxu0 0
    %1351 = vmatprep.subr.bf16.mxu0 0
    %1352 = vmatpush2.bf16.xpose.msra.mxu0 0
    %1353 = vmatprep.subr.bf16.mxu0 0
    %1354 = vmatpush2.bf16.xpose.msra.mxu0 0
    %1355 = vmatprep.subr.bf16.mxu0 0
    %1356 = vmatpush2.bf16.xpose.msra.mxu0 0
    %1357 = vmatprep.mubr.bf16.mxu0 0
    %1358 = vmatmul.mubr.bf16.gmra.mxu0 %v1320
    %v1359 = vpop.f32.mrf.mxu0
    %v1360 = vadd.f32 0.0, %v1359
    %v1361 = vpop.f32.mrf.mxu0
    %v1362 = vpop.f32.mrf.mxu0
    %v1363 = vpop.f32.mrf.mxu0
    %1364 = vdwg.mxu0
    %1365 = vrot.lane.b32.xlu0 %v1094, 112
    %v1366 = vpop.permute.xlu0 %1365
    %1367 = vrot.lane.b32.xlu0 %v1094, 80
    %v1368 = vpop.permute.xlu0 %1367
    %v1370 = vsel %vm193, %v1366, 0
    %v1373 = vsel %vm193, %v1368, 0
    %1375 = vmatprep.subr.bf16.mxu0 0
    %1376 = vmatpush1.bf16.xpose.msra.mxu0 0
    %1377 = vmatprep.subr.bf16.mxu0 0
    %1378 = vmatpush1.bf16.xpose.msra.mxu0 0
    %1379 = vmatprep.subr.bf16.mxu0 0
    %1380 = vmatpush1.bf16.xpose.msra.mxu0 0
    %1381 = vmatprep.subr.bf16.mxu0 0
    %1382 = vmatpush1.bf16.xpose.msra.mxu0 0
    %1383 = vmatprep.subr.bf16.mxu0 0
    %1384 = vmatpush1.bf16.xpose.msra.mxu0 0
    %1385 = vmatprep.subr.bf16.mxu0 0
    %1386 = vmatpush1.bf16.xpose.msra.mxu0 0
    %1387 = vmatprep.subr.bf16.mxu0 0
    %1388 = vmatpush1.bf16.xpose.msra.mxu0 0
    %1389 = vmatprep.subr.bf16.mxu0 0
    %1390 = vmatpush1.bf16.xpose.msra.mxu0 %v1373
    %1391 = vmatprep.subr.bf16.mxu0 0
    %1392 = vmatpush2.bf16.xpose.msra.mxu0 0
    %1393 = vmatprep.subr.bf16.mxu0 0
    %1394 = vmatpush2.bf16.xpose.msra.mxu0 0
    %1395 = vmatprep.subr.bf16.mxu0 0
    %1396 = vmatpush2.bf16.xpose.msra.mxu0 0
    %1397 = vmatprep.subr.bf16.mxu0 0
    %1398 = vmatpush2.bf16.xpose.msra.mxu0 0
    %1399 = vmatprep.subr.bf16.mxu0 0
    %1400 = vmatpush2.bf16.xpose.msra.mxu0 0
    %1401 = vmatprep.subr.bf16.mxu0 0
    %1402 = vmatpush2.bf16.xpose.msra.mxu0 0
    %1403 = vmatprep.subr.bf16.mxu0 0
    %1404 = vmatpush2.bf16.xpose.msra.mxu0 0
    %1405 = vmatprep.subr.bf16.mxu0 0
    %1406 = vmatpush2.bf16.xpose.msra.mxu0 0
    %1407 = vmatprep.mubr.bf16.mxu0 0
    %1408 = vmatmul.mubr.bf16.gmra.mxu0 %v1370
    %v1409 = vpop.f32.mrf.mxu0
    %v1410 = vadd.f32 0.0, %v1409
    %v1411 = vpop.f32.mrf.mxu0
    %v1412 = vpop.f32.mrf.mxu0
    %v1413 = vpop.f32.mrf.mxu0
    %1414 = vdwg.mxu0
    %v1415 = vmul.f32 %v1360, 0.25
    %v1416 = vmul.f32 %v1410, 0.25
    %v1417 = vadd.f32 %v1415, %v295
    %v1418 = vadd.f32 %v1416, %v299
    %v1419 = vsel %vm304, %v1417, -inf
    %1420 = vmax.xlane.f32.xlu0 %v1419
    %v1421 = vpop.xlane.xlu0 %1420
    %v1422 = vsel %vm304, %v1418, -inf
    %1423 = vmax.xlane.f32.xlu0 %v1422
    %v1424 = vpop.xlane.xlu0 %1423
    %v1425 = vsub.f32 %v1417, %v1421
    %v1426 = vsub.f32 %v1418, %v1424
    %v1427 = vmul.f32 %v1425, 1.442695
    %v1428 = vpow.pop %v1427
    %v1429 = vmul.f32 %v1426, 1.442695
    %v1430 = vpow.pop %v1429
    %v1431 = vsel %vm304, %v1428, 0.0
    %1432 = vadd.xlane.f32.xlu0 %v1431
    %v1433 = vpop.xlane.xlu0 %1432
    %v1434 = vsel %vm304, %v1430, 0.0
    %1435 = vadd.xlane.f32.xlu0 %v1434
    %v1436 = vpop.xlane.xlu0 %1435
    %v1437 = vrcp.pop %v1433
    %v1438 = vrcp.pop %v1436
    %v1439 = vmul.f32 %v1428, %v1437
    %v1440 = vmul.f32 %v1430, %v1438
    %v1441 = vpack.c.bf16 %v1439, %v1439
    %v1442 = vpack.c.bf16 %v1440, %v1440
    %1443 = vrot.lane.b32.xlu0 %v1093, 48
    %v1444 = vpop.permute.xlu0 %1443
    %v1446 = vsel %vm304, %v1441, 0
    %v1449 = vsel %vm334, %v1444, 0
    %1451 = vmatprep.subr.bf16.mxu0 0
    %1452 = vmatpush1.bf16.msra.mxu0 0
    %1453 = vmatprep.subr.bf16.mxu0 0
    %1454 = vmatpush1.bf16.msra.mxu0 0
    %1455 = vmatprep.subr.bf16.mxu0 0
    %1456 = vmatpush1.bf16.msra.mxu0 0
    %1457 = vmatprep.subr.bf16.mxu0 0
    %1458 = vmatpush1.bf16.msra.mxu0 0
    %1459 = vmatprep.subr.bf16.mxu0 0
    %1460 = vmatpush1.bf16.msra.mxu0 0
    %1461 = vmatprep.subr.bf16.mxu0 0
    %1462 = vmatpush1.bf16.msra.mxu0 0
    %1463 = vmatprep.subr.bf16.mxu0 0
    %1464 = vmatpush1.bf16.msra.mxu0 0
    %1465 = vmatprep.subr.bf16.mxu0 0
    %1466 = vmatpush1.bf16.msra.mxu0 %v1449
    %1467 = vmatprep.subr.bf16.mxu0 0
    %1468 = vmatpush2.bf16.msra.mxu0 0
    %1469 = vmatprep.subr.bf16.mxu0 0
    %1470 = vmatpush2.bf16.msra.mxu0 0
    %1471 = vmatprep.subr.bf16.mxu0 0
    %1472 = vmatpush2.bf16.msra.mxu0 0
    %1473 = vmatprep.subr.bf16.mxu0 0
    %1474 = vmatpush2.bf16.msra.mxu0 0
    %1475 = vmatprep.subr.bf16.mxu0 0
    %1476 = vmatpush2.bf16.msra.mxu0 0
    %1477 = vmatprep.subr.bf16.mxu0 0
    %1478 = vmatpush2.bf16.msra.mxu0 0
    %1479 = vmatprep.subr.bf16.mxu0 0
    %1480 = vmatpush2.bf16.msra.mxu0 0
    %1481 = vmatprep.subr.bf16.mxu0 0
    %1482 = vmatpush2.bf16.msra.mxu0 0
    %1483 = vmatprep.mubr.bf16.mxu0 0
    %1484 = vmatmul.mubr.bf16.gmra.mxu0 %v1446
    %v1485 = vpop.f32.mrf.mxu0
    %v1486 = vadd.f32 0.0, %v1485
    %v1487 = vpop.f32.mrf.mxu0
    %v1488 = vpop.f32.mrf.mxu0
    %v1489 = vpop.f32.mrf.mxu0
    %1490 = vdwg.mxu0
    %1491 = vrot.lane.b32.xlu0 %v1094, 48
    %v1492 = vpop.permute.xlu0 %1491
    %v1494 = vsel %vm304, %v1442, 0
    %v1497 = vsel %vm334, %v1492, 0
    %1499 = vmatprep.subr.bf16.mxu0 0
    %1500 = vmatpush1.bf16.msra.mxu0 0
    %1501 = vmatprep.subr.bf16.mxu0 0
    %1502 = vmatpush1.bf16.msra.mxu0 0
    %1503 = vmatprep.subr.bf16.mxu0 0
    %1504 = vmatpush1.bf16.msra.mxu0 0
    %1505 = vmatprep.subr.bf16.mxu0 0
    %1506 = vmatpush1.bf16.msra.mxu0 0
    %1507 = vmatprep.subr.bf16.mxu0 0
    %1508 = vmatpush1.bf16.msra.mxu0 0
    %1509 = vmatprep.subr.bf16.mxu0 0
    %1510 = vmatpush1.bf16.msra.mxu0 0
    %1511 = vmatprep.subr.bf16.mxu0 0
    %1512 = vmatpush1.bf16.msra.mxu0 0
    %1513 = vmatprep.subr.bf16.mxu0 0
    %1514 = vmatpush1.bf16.msra.mxu0 %v1497
    %1515 = vmatprep.subr.bf16.mxu0 0
    %1516 = vmatpush2.bf16.msra.mxu0 0
    %1517 = vmatprep.subr.bf16.mxu0 0
    %1518 = vmatpush2.bf16.msra.mxu0 0
    %1519 = vmatprep.subr.bf16.mxu0 0
    %1520 = vmatpush2.bf16.msra.mxu0 0
    %1521 = vmatprep.subr.bf16.mxu0 0
    %1522 = vmatpush2.bf16.msra.mxu0 0
    %1523 = vmatprep.subr.bf16.mxu0 0
    %1524 = vmatpush2.bf16.msra.mxu0 0
    %1525 = vmatprep.subr.bf16.mxu0 0
    %1526 = vmatpush2.bf16.msra.mxu0 0
    %1527 = vmatprep.subr.bf16.mxu0 0
    %1528 = vmatpush2.bf16.msra.mxu0 0
    %1529 = vmatprep.subr.bf16.mxu0 0
    %1530 = vmatpush2.bf16.msra.mxu0 0
    %1531 = vmatprep.mubr.bf16.mxu0 0
    %1532 = vmatmul.mubr.bf16.gmra.mxu0 %v1494
    %v1533 = vpop.f32.mrf.mxu0
    %v1534 = vadd.f32 0.0, %v1533
    %v1535 = vpop.f32.mrf.mxu0
    %v1536 = vpop.f32.mrf.mxu0
    %v1537 = vpop.f32.mrf.mxu0
    %1538 = vdwg.mxu0
    %1541 = vrot.lane.b32.xlu0 %v1486, 16
    %v1542 = vpop.permute.xlu0 %1541
    %1543 = vrot.lane.b32.xlu0 %v1534, 16
    %v1544 = vpop.permute.xlu0 %1543
    %v1547 = vsel %vm193, %v1262, %v1542
    %v1548 = vsel %vm193, %v1310, %v1544
    %v1549 = vpack.c.bf16 %v1548, %v1547
    %s1550 = scalar_lea.vmem %s6, 16
    %v1551 = vld [vmem:[%s1550] sm:$0xf]
    %v1552 = vld [vmem:[%s1550 + $0x4] sm:$0xf]
    %v1553 = vld [vmem:[%s1550 + $0x8] sm:$0xf]
    %v1554 = vld [vmem:[%s1550 + $0xc] sm:$0xf]
    %s1555 = scalar_lea.vmem %s7, 1
    %v1556 = vld [vmem:[%s1555] sm:$0x1]
    %v1558 = vlaneseq
    %v1559 = vshrl.u32 %v1558, 7
    %v1560 = vsub.s32 0, %v1559
    %v1561 = vrot.slane %v1556, %v1560
    %v1567 = vunpack.c.l.b16 %v1551
    %v1568 = vunpack.c.l.b16 %v1552
    %v1569 = vunpack.c.l.b16 %v1553
    %v1570 = vunpack.c.l.b16 %v1554
    %v1571 = vpack.c.b16 %v1568, %v1567
    %v1572 = vpack.c.b16 %v1570, %v1569
    %v1576 = vsel %vm71, %v1549, 0
    %1578 = vmatprep.subr.bf16.mxu0 0
    %1579 = vmatpush1.bf16.msra.mxu0 0
    %1580 = vmatprep.subr.bf16.mxu0 0
    %1581 = vmatpush1.bf16.msra.mxu0 0
    %1582 = vmatprep.subr.bf16.mxu0 0
    %1583 = vmatpush1.bf16.msra.mxu0 0
    %1584 = vmatprep.subr.bf16.mxu0 0
    %1585 = vmatpush1.bf16.msra.mxu0 0
    %1586 = vmatprep.subr.bf16.mxu0 0
    %1587 = vmatpush1.bf16.msra.mxu0 0
    %1588 = vmatprep.subr.bf16.mxu0 0
    %1589 = vmatpush1.bf16.msra.mxu0 0
    %1590 = vmatprep.subr.bf16.mxu0 0
    %1591 = vmatpush1.bf16.msra.mxu0 %v1572
    %1592 = vmatprep.subr.bf16.mxu0 0
    %1593 = vmatpush1.bf16.msra.mxu0 %v1571
    %1594 = vmatprep.subr.bf16.mxu0 0
    %1595 = vmatpush2.bf16.msra.mxu0 0
    %1596 = vmatprep.subr.bf16.mxu0 0
    %1597 = vmatpush2.bf16.msra.mxu0 0
    %1598 = vmatprep.subr.bf16.mxu0 0
    %1599 = vmatpush2.bf16.msra.mxu0 0
    %1600 = vmatprep.subr.bf16.mxu0 0
    %1601 = vmatpush2.bf16.msra.mxu0 0
    %1602 = vmatprep.subr.bf16.mxu0 0
    %1603 = vmatpush2.bf16.msra.mxu0 0
    %1604 = vmatprep.subr.bf16.mxu0 0
    %1605 = vmatpush2.bf16.msra.mxu0 0
    %1606 = vmatprep.subr.bf16.mxu0 0
    %1607 = vmatpush2.bf16.msra.mxu0 0
    %1608 = vmatprep.subr.bf16.mxu0 0
    %1609 = vmatpush2.bf16.msra.mxu0 0
    %1610 = vmatprep.mubr.bf16.mxu0 0
    %1611 = vmatmul.mubr.bf16.gmra.mxu0 %v1576
    %v1612 = vpop.f32.mrf.mxu0
    %v1613 = vadd.f32 %v1561, %v1612
    %v1614 = vpop.f32.mrf.mxu0
    %v1615 = vpop.f32.mrf.mxu0
    %v1616 = vadd.f32 %v1561, %v1615
    %v1617 = vpop.f32.mrf.mxu0
    %1618 = vdwg.mxu0
    %v1619 = vadd.f32 %v1613, %v1017
    %v1620 = vadd.f32 %v1616, %v1018
    %s1621 = scalar_lea.vmem %s8, 1
    %v1622 = vld [vmem:[%s1621] sm:$0x1]
    %s1623 = scalar_lea.vmem %s9, 1
    %v1624 = vld [vmem:[%s1623] sm:$0x1]
    %v1625 = vsel %vm71, %v1619, 0.0
    %1626 = vadd.xlane.f32.xlu0 %v1625
    %v1627 = vpop.xlane.xlu0 %1626
    %v1628 = vsel %vm71, %v1620, 0.0
    %1629 = vadd.xlane.f32.xlu0 %v1628
    %v1630 = vpop.xlane.xlu0 %1629
    %v1631 = vmul.f32 %v1627, %v78
    %v1632 = vmul.f32 %v1630, %v78
    %v1633 = vsub.f32 %v1619, %v1631
    %v1634 = vsub.f32 %v1620, %v1632
    %v1635 = vmul.f32 %v1633, %v1633
    %v1636 = vmul.f32 %v1634, %v1634
    %v1637 = vsel %vm71, %v1635, 0.0
    %1638 = vadd.xlane.f32.xlu0 %v1637
    %v1639 = vpop.xlane.xlu0 %1638
    %v1640 = vsel %vm71, %v1636, 0.0
    %1641 = vadd.xlane.f32.xlu0 %v1640
    %v1642 = vpop.xlane.xlu0 %1641
    %v1643 = vmul.f32 %v1639, %v78
    %v1644 = vmul.f32 %v1642, %v78
    %v1645 = vadd.f32 %v1643, 1e-12
    %v1646 = vadd.f32 %v1644, 1e-12
    %v1647 = vrsqrt.pop %v1645
    %v1648 = vrsqrt.pop %v1646
    %v1649 = vmul.f32 %v1633, %v1647
    %v1650 = vmul.f32 %v1634, %v1648
    %v1652 = vlaneseq
    %v1653 = vshrl.u32 %v1652, 7
    %v1654 = vsub.s32 0, %v1653
    %v1655 = vrot.slane %v1622, %v1654
    %v1657 = vmul.f32 %v1649, %v1655
    %v1658 = vmul.f32 %v1650, %v1655
    %v1660 = vlaneseq
    %v1661 = vshrl.u32 %v1660, 7
    %v1662 = vsub.s32 0, %v1661
    %v1663 = vrot.slane %v1624, %v1662
    %v1665 = vadd.f32 %v1657, %v1663
    %v1666 = vadd.f32 %v1658, %v1663
    %v1667 = vpack.c.bf16 %v1666, %v1665
    %s1668 = scalar_lea.vmem %s10, 16
    %v1669 = vld [vmem:[%s1668] sm:$0xf]
    %v1670 = vld [vmem:[%s1668 + $0x4] sm:$0xf]
    %v1671 = vld [vmem:[%s1668 + $0x8] sm:$0xf]
    %v1672 = vld [vmem:[%s1668 + $0xc] sm:$0xf]
    %s1673 = scalar_lea.vmem %s11, 1
    %v1674 = vld [vmem:[%s1673] sm:$0x1]
    %v1676 = vlaneseq
    %v1677 = vshrl.u32 %v1676, 7
    %v1678 = vsub.s32 0, %v1677
    %v1679 = vrot.slane %v1674, %v1678
    %v1685 = vunpack.c.l.b16 %v1669
    %v1686 = vunpack.c.l.b16 %v1670
    %v1687 = vunpack.c.l.b16 %v1671
    %v1688 = vunpack.c.l.b16 %v1672
    %v1689 = vpack.c.b16 %v1686, %v1685
    %v1690 = vpack.c.b16 %v1688, %v1687
    %v1694 = vsel %vm71, %v1667, 0
    %1696 = vmatprep.subr.bf16.mxu0 0
    %1697 = vmatpush1.bf16.msra.mxu0 0
    %1698 = vmatprep.subr.bf16.mxu0 0
    %1699 = vmatpush1.bf16.msra.mxu0 0
    %1700 = vmatprep.subr.bf16.mxu0 0
    %1701 = vmatpush1.bf16.msra.mxu0 0
    %1702 = vmatprep.subr.bf16.mxu0 0
    %1703 = vmatpush1.bf16.msra.mxu0 0
    %1704 = vmatprep.subr.bf16.mxu0 0
    %1705 = vmatpush1.bf16.msra.mxu0 0
    %1706 = vmatprep.subr.bf16.mxu0 0
    %1707 = vmatpush1.bf16.msra.mxu0 0
    %1708 = vmatprep.subr.bf16.mxu0 0
    %1709 = vmatpush1.bf16.msra.mxu0 %v1690
    %1710 = vmatprep.subr.bf16.mxu0 0
    %1711 = vmatpush1.bf16.msra.mxu0 %v1689
    %1712 = vmatprep.subr.bf16.mxu0 0
    %1713 = vmatpush2.bf16.msra.mxu0 0
    %1714 = vmatprep.subr.bf16.mxu0 0
    %1715 = vmatpush2.bf16.msra.mxu0 0
    %1716 = vmatprep.subr.bf16.mxu0 0
    %1717 = vmatpush2.bf16.msra.mxu0 0
    %1718 = vmatprep.subr.bf16.mxu0 0
    %1719 = vmatpush2.bf16.msra.mxu0 0
    %1720 = vmatprep.subr.bf16.mxu0 0
    %1721 = vmatpush2.bf16.msra.mxu0 0
    %1722 = vmatprep.subr.bf16.mxu0 0
    %1723 = vmatpush2.bf16.msra.mxu0 0
    %1724 = vmatprep.subr.bf16.mxu0 0
    %1725 = vmatpush2.bf16.msra.mxu0 0
    %1726 = vmatprep.subr.bf16.mxu0 0
    %1727 = vmatpush2.bf16.msra.mxu0 0
    %1728 = vmatprep.mubr.bf16.mxu0 0
    %1729 = vmatmul.mubr.bf16.gmra.mxu0 %v1694
    %v1730 = vpop.f32.mrf.mxu0
    %v1731 = vadd.f32 %v1679, %v1730
    %v1732 = vpop.f32.mrf.mxu0
    %v1733 = vpop.f32.mrf.mxu0
    %v1734 = vadd.f32 %v1679, %v1733
    %v1735 = vpop.f32.mrf.mxu0
    %1736 = vdwg.mxu0
    %v1737 = vmul.f32 %v1731, 0.5
    %v1738 = vmul.f32 %v1734, 0.5
    %v1739 = vmul.f32 %v1731, 0.044715
    %v1740 = vmul.f32 %v1734, 0.044715
    %v1741 = vmul.f32 %v1739, %v1731
    %v1742 = vmul.f32 %v1740, %v1734
    %v1743 = vmul.f32 %v1741, %v1731
    %v1744 = vmul.f32 %v1742, %v1734
    %v1745 = vadd.f32 %v1731, %v1743
    %v1746 = vadd.f32 %v1734, %v1744
    %v1747 = vmul.f32 %v1745, 0.7978846
    %v1748 = vmul.f32 %v1746, 0.7978846
    %v1749 = vtanh.pop %v1747
    %v1750 = vtanh.pop %v1748
    %v1751 = vadd.f32 %v1749, 1.0
    %v1752 = vadd.f32 %v1750, 1.0
    %v1753 = vmul.f32 %v1737, %v1751
    %v1754 = vmul.f32 %v1738, %v1752
    %v1755 = vpack.c.bf16 %v1754, %v1753
    %s1756 = scalar_lea.vmem %s12, 64
    %v1757 = vld [vmem:[%s1756] sm:$0xf]
    %v1758 = vld [vmem:[%s1756 + $0x4] sm:$0xf]
    %v1759 = vld [vmem:[%s1756 + $0x8] sm:$0xf]
    %v1760 = vld [vmem:[%s1756 + $0xc] sm:$0xf]
    %v1761 = vld [vmem:[%s1756 + $0x10] sm:$0xf]
    %v1762 = vld [vmem:[%s1756 + $0x14] sm:$0xf]
    %v1763 = vld [vmem:[%s1756 + $0x18] sm:$0xf]
    %v1764 = vld [vmem:[%s1756 + $0x1c] sm:$0xf]
    %v1765 = vld [vmem:[%s1756 + $0x20] sm:$0xf]
    %v1766 = vld [vmem:[%s1756 + $0x24] sm:$0xf]
    %v1767 = vld [vmem:[%s1756 + $0x28] sm:$0xf]
    %v1768 = vld [vmem:[%s1756 + $0x2c] sm:$0xf]
    %v1769 = vld [vmem:[%s1756 + $0x30] sm:$0xf]
    %v1770 = vld [vmem:[%s1756 + $0x34] sm:$0xf]
    %v1771 = vld [vmem:[%s1756 + $0x38] sm:$0xf]
    %v1772 = vld [vmem:[%s1756 + $0x3c] sm:$0xf]
    %s1773 = scalar_lea.vmem %s13, 1
    %v1774 = vld [vmem:[%s1773] sm:$0x1]
    %v1776 = vlaneseq
    %v1777 = vshrl.u32 %v1776, 7
    %v1778 = vsub.s32 0, %v1777
    %v1779 = vrot.slane %v1774, %v1778
    %v1797 = vunpack.c.l.b16 %v1757
    %v1798 = vunpack.c.l.b16 %v1758
    %v1799 = vunpack.c.l.b16 %v1759
    %v1800 = vunpack.c.l.b16 %v1760
    %v1801 = vunpack.c.l.b16 %v1761
    %v1802 = vunpack.c.l.b16 %v1762
    %v1803 = vunpack.c.l.b16 %v1763
    %v1804 = vunpack.c.l.b16 %v1764
    %v1805 = vunpack.c.l.b16 %v1765
    %v1806 = vunpack.c.l.b16 %v1766
    %v1807 = vunpack.c.l.b16 %v1767
    %v1808 = vunpack.c.l.b16 %v1768
    %v1809 = vunpack.c.l.b16 %v1769
    %v1810 = vunpack.c.l.b16 %v1770
    %v1811 = vunpack.c.l.b16 %v1771
    %v1812 = vunpack.c.l.b16 %v1772
    %v1813 = vpack.c.b16 %v1798, %v1797
    %v1814 = vpack.c.b16 %v1800, %v1799
    %v1815 = vpack.c.b16 %v1802, %v1801
    %v1816 = vpack.c.b16 %v1804, %v1803
    %v1817 = vpack.c.b16 %v1806, %v1805
    %v1818 = vpack.c.b16 %v1808, %v1807
    %v1819 = vpack.c.b16 %v1810, %v1809
    %v1820 = vpack.c.b16 %v1812, %v1811
    %1829 = vmatprep.subr.bf16.mxu0 0
    %1830 = vmatpush1.bf16.msra.mxu0 %v1820
    %1831 = vmatprep.subr.bf16.mxu0 0
    %1832 = vmatpush1.bf16.msra.mxu0 %v1819
    %1833 = vmatprep.subr.bf16.mxu0 0
    %1834 = vmatpush1.bf16.msra.mxu0 %v1818
    %1835 = vmatprep.subr.bf16.mxu0 0
    %1836 = vmatpush1.bf16.msra.mxu0 %v1817
    %1837 = vmatprep.subr.bf16.mxu0 0
    %1838 = vmatpush1.bf16.msra.mxu0 %v1816
    %1839 = vmatprep.subr.bf16.mxu0 0
    %1840 = vmatpush1.bf16.msra.mxu0 %v1815
    %1841 = vmatprep.subr.bf16.mxu0 0
    %1842 = vmatpush1.bf16.msra.mxu0 %v1814
    %1843 = vmatprep.subr.bf16.mxu0 0
    %1844 = vmatpush1.bf16.msra.mxu0 %v1813
    %1845 = vmatprep.subr.bf16.mxu0 0
    %1846 = vmatpush2.bf16.msra.mxu0 0
    %1847 = vmatprep.subr.bf16.mxu0 0
    %1848 = vmatpush2.bf16.msra.mxu0 0
    %1849 = vmatprep.subr.bf16.mxu0 0
    %1850 = vmatpush2.bf16.msra.mxu0 0
    %1851 = vmatprep.subr.bf16.mxu0 0
    %1852 = vmatpush2.bf16.msra.mxu0 0
    %1853 = vmatprep.subr.bf16.mxu0 0
    %1854 = vmatpush2.bf16.msra.mxu0 0
    %1855 = vmatprep.subr.bf16.mxu0 0
    %1856 = vmatpush2.bf16.msra.mxu0 0
    %1857 = vmatprep.subr.bf16.mxu0 0
    %1858 = vmatpush2.bf16.msra.mxu0 0
    %1859 = vmatprep.subr.bf16.mxu0 0
    %1860 = vmatpush2.bf16.msra.mxu0 0
    %1861 = vmatprep.mubr.bf16.mxu0 0
    %1862 = vmatmul.mubr.bf16.gmra.mxu0 %v1755
    %v1863 = vpop.f32.mrf.mxu0
    %v1864 = vadd.f32 %v1779, %v1863
    %v1865 = vpop.f32.mrf.mxu0
    %v1866 = vpop.f32.mrf.mxu0
    %v1867 = vadd.f32 %v1779, %v1866
    %v1868 = vpop.f32.mrf.mxu0
    %1869 = vdwg.mxu0
    %v1870 = vadd.f32 %v1864, %v1665
    %v1871 = vadd.f32 %v1867, %v1666
    %s1872 = scalar_lea.vmem %s14, 1
    %v1873 = vld [vmem:[%s1872] sm:$0x1]
    %s1874 = scalar_lea.vmem %s15, 1
    %v1875 = vld [vmem:[%s1874] sm:$0x1]
    %v1876 = vsel %vm71, %v1870, 0.0
    %1877 = vadd.xlane.f32.xlu0 %v1876
    %v1878 = vpop.xlane.xlu0 %1877
    %v1879 = vsel %vm71, %v1871, 0.0
    %1880 = vadd.xlane.f32.xlu0 %v1879
    %v1881 = vpop.xlane.xlu0 %1880
    %v1882 = vmul.f32 %v1878, %v78
    %v1883 = vmul.f32 %v1881, %v78
    %v1884 = vsub.f32 %v1870, %v1882
    %v1885 = vsub.f32 %v1871, %v1883
    %v1886 = vmul.f32 %v1884, %v1884
    %v1887 = vmul.f32 %v1885, %v1885
    %v1888 = vsel %vm71, %v1886, 0.0
    %1889 = vadd.xlane.f32.xlu0 %v1888
    %v1890 = vpop.xlane.xlu0 %1889
    %v1891 = vsel %vm71, %v1887, 0.0
    %1892 = vadd.xlane.f32.xlu0 %v1891
    %v1893 = vpop.xlane.xlu0 %1892
    %v1894 = vmul.f32 %v1890, %v78
    %v1895 = vmul.f32 %v1893, %v78
    %v1896 = vadd.f32 %v1894, 1e-12
    %v1897 = vadd.f32 %v1895, 1e-12
    %v1898 = vrsqrt.pop %v1896
    %v1899 = vrsqrt.pop %v1897
    %v1900 = vmul.f32 %v1884, %v1898
    %v1901 = vmul.f32 %v1885, %v1899
    %v1903 = vlaneseq
    %v1904 = vshrl.u32 %v1903, 7
    %v1905 = vsub.s32 0, %v1904
    %v1906 = vrot.slane %v1873, %v1905
    %v1908 = vmul.f32 %v1900, %v1906
    %v1909 = vmul.f32 %v1901, %v1906
    %v1911 = vlaneseq
    %v1912 = vshrl.u32 %v1911, 7
    %v1913 = vsub.s32 0, %v1912
    %v1914 = vrot.slane %v1875, %v1913
    %v1916 = vadd.f32 %v1908, %v1914
    %v1917 = vadd.f32 %v1909, %v1914
    %v1918 = vpack.c.bf16 %v1916, %v1916
    %v1919 = vpack.c.bf16 %v1917, %v1917
    %v1920 = vld [vmem:[%s16] sm:$0xf]
    %v1921 = vld [vmem:[%s16 + $0x4] sm:$0xf]
    %v1922 = vld [vmem:[%s16 + $0x8] sm:$0xf]
    %v1923 = vld [vmem:[%s16 + $0xc] sm:$0xf]
    %v1924 = vld [vmem:[%s17] sm:$0x1]
    %v1926 = vlaneseq
    %v1927 = vshrl.u32 %v1926, 7
    %v1928 = vsub.s32 0, %v1927
    %v1929 = vrot.slane %v1924, %v1928
    %v1933 = vunpack.c.l.b16 %v1918
    %v1934 = vunpack.c.l.b16 %v1919
    %v1935 = vrot.slane %v1934, 7
    %vm1936 = vcmask 1041409
    %v1937 = vsel %vm1936, %v1935, %v1933
    %v1938 = vpack.c.b16 %v1937, %v1937
    %v1943 = vunpack.c.l.b16 %v1920
    %v1944 = vunpack.c.l.b16 %v1921
    %v1945 = vunpack.c.l.b16 %v1922
    %v1946 = vunpack.c.l.b16 %v1923
    %v1947 = vpack.c.b16 %v1944, %v1943
    %v1948 = vpack.c.b16 %v1946, %v1945
    %v1952 = vsel %vm71, %v1938, 0
    %1954 = vmatprep.subr.bf16.mxu0 0
    %1955 = vmatpush1.bf16.msra.mxu0 0
    %1956 = vmatprep.subr.bf16.mxu0 0
    %1957 = vmatpush1.bf16.msra.mxu0 0
    %1958 = vmatprep.subr.bf16.mxu0 0
    %1959 = vmatpush1.bf16.msra.mxu0 0
    %1960 = vmatprep.subr.bf16.mxu0 0
    %1961 = vmatpush1.bf16.msra.mxu0 0
    %1962 = vmatprep.subr.bf16.mxu0 0
    %1963 = vmatpush1.bf16.msra.mxu0 0
    %1964 = vmatprep.subr.bf16.mxu0 0
    %1965 = vmatpush1.bf16.msra.mxu0 0
    %1966 = vmatprep.subr.bf16.mxu0 0
    %1967 = vmatpush1.bf16.msra.mxu0 %v1948
    %1968 = vmatprep.subr.bf16.mxu0 0
    %1969 = vmatpush1.bf16.msra.mxu0 %v1947
    %1970 = vmatprep.subr.bf16.mxu0 0
    %1971 = vmatpush2.bf16.msra.mxu0 0
    %1972 = vmatprep.subr.bf16.mxu0 0
    %1973 = vmatpush2.bf16.msra.mxu0 0
    %1974 = vmatprep.subr.bf16.mxu0 0
    %1975 = vmatpush2.bf16.msra.mxu0 0
    %1976 = vmatprep.subr.bf16.mxu0 0
    %1977 = vmatpush2.bf16.msra.mxu0 0
    %1978 = vmatprep.subr.bf16.mxu0 0
    %1979 = vmatpush2.bf16.msra.mxu0 0
    %1980 = vmatprep.subr.bf16.mxu0 0
    %1981 = vmatpush2.bf16.msra.mxu0 0
    %1982 = vmatprep.subr.bf16.mxu0 0
    %1983 = vmatpush2.bf16.msra.mxu0 0
    %1984 = vmatprep.subr.bf16.mxu0 0
    %1985 = vmatpush2.bf16.msra.mxu0 0
    %1986 = vmatprep.mubr.bf16.mxu0 0
    %1987 = vmatmul.mubr.bf16.gmra.mxu0 %v1952
    %v1988 = vpop.f32.mrf.mxu0
    %v1989 = vadd.f32 %v1929, %v1988
    %v1990 = vpop.f32.mrf.mxu0
    %v1991 = vpop.f32.mrf.mxu0
    %v1992 = vpop.f32.mrf.mxu0
    %1993 = vdwg.mxu0
    %v1994 = vtanh.pop %v1989
    %v1995 = vpack.c.bf16 %v1994, %v1994
    %v1996 = vld [vmem:[%s18] sm:$0xf]
    %v1997 = vld [vmem:[%s18 + $0x4] sm:$0xf]
    %v1998 = vld [vmem:[%s18 + $0x8] sm:$0xf]
    %v1999 = vld [vmem:[%s18 + $0xc] sm:$0xf]
    %v2000 = vld [vmem:[%s19] sm:$0x1]
    %v2002 = vlaneseq
    %v2003 = vshrl.u32 %v2002, 7
    %v2004 = vsub.s32 0, %v2003
    %v2005 = vrot.slane %v2000, %v2004
    %v2011 = vunpack.c.l.b16 %v1996
    %v2012 = vunpack.c.l.b16 %v1997
    %v2013 = vunpack.c.l.b16 %v1998
    %v2014 = vunpack.c.l.b16 %v1999
    %v2015 = vpack.c.b16 %v2012, %v2011
    %v2016 = vpack.c.b16 %v2014, %v2013
    %v2020 = vsel %vm71, %v1995, 0
    %2022 = vmatprep.subr.bf16.mxu0 0
    %2023 = vmatpush1.bf16.msra.mxu0 0
    %2024 = vmatprep.subr.bf16.mxu0 0
    %2025 = vmatpush1.bf16.msra.mxu0 0
    %2026 = vmatprep.subr.bf16.mxu0 0
    %2027 = vmatpush1.bf16.msra.mxu0 0
    %2028 = vmatprep.subr.bf16.mxu0 0
    %2029 = vmatpush1.bf16.msra.mxu0 0
    %2030 = vmatprep.subr.bf16.mxu0 0
    %2031 = vmatpush1.bf16.msra.mxu0 0
    %2032 = vmatprep.subr.bf16.mxu0 0
    %2033 = vmatpush1.bf16.msra.mxu0 0
    %2034 = vmatprep.subr.bf16.mxu0 0
    %2035 = vmatpush1.bf16.msra.mxu0 %v2016
    %2036 = vmatprep.subr.bf16.mxu0 0
    %2037 = vmatpush1.bf16.msra.mxu0 %v2015
    %2038 = vmatprep.subr.bf16.mxu0 0
    %2039 = vmatpush2.bf16.msra.mxu0 0
    %2040 = vmatprep.subr.bf16.mxu0 0
    %2041 = vmatpush2.bf16.msra.mxu0 0
    %2042 = vmatprep.subr.bf16.mxu0 0
    %2043 = vmatpush2.bf16.msra.mxu0 0
    %2044 = vmatprep.subr.bf16.mxu0 0
    %2045 = vmatpush2.bf16.msra.mxu0 0
    %2046 = vmatprep.subr.bf16.mxu0 0
    %2047 = vmatpush2.bf16.msra.mxu0 0
    %2048 = vmatprep.subr.bf16.mxu0 0
    %2049 = vmatpush2.bf16.msra.mxu0 0
    %2050 = vmatprep.subr.bf16.mxu0 0
    %2051 = vmatpush2.bf16.msra.mxu0 0
    %2052 = vmatprep.subr.bf16.mxu0 0
    %2053 = vmatpush2.bf16.msra.mxu0 0
    %2054 = vmatprep.mubr.bf16.mxu0 0
    %2055 = vmatmul.mubr.bf16.gmra.mxu0 %v2020
    %v2056 = vpop.f32.mrf.mxu0
    %v2057 = vadd.f32 %v2005, %v2056
    %v2058 = vpop.f32.mrf.mxu0
    %v2059 = vpop.f32.mrf.mxu0
    %v2060 = vpop.f32.mrf.mxu0
    %2061 = vdwg.mxu0
    %2062 = vst [vmem:[#allocation2] sm:$0x3] %v2057
    // Predicated region
    $region82: #{_fwd.1} parent=1 // pred_check
      _
    $region83: #{_fwd.1} parent=1 // pred_check_branch
      %2064 = sbr.rel (0) target = $region85
    $region84: #{_fwd.1} parent=1 // pred_region
      %s2066 = ssub.s32 32, 32
      %2067 = vsyncadd [#allocation3], %s2066
      %s2069 = sshll.u32 [#allocation2], 4
      %s2070 = int_to_ptr.vmem [resolvable:$true] %s2069
      %2072 = dma.vmem_to_hbm [thread:$0]  %s2070, 32, %s20, [#allocation3]
    $region85: #{_fwd.1} parent=1 // pred_fallthru
      _
    // Predicated region
    $region86: #{_fwd.1} parent=1 // pred_check
      _
    $region87: #{_fwd.1} parent=1 // pred_check_branch
      %2074 = sbr.rel (0) target = $region89
    $region88: #{_fwd.1} parent=1 // pred_region
      %2075 = dma.done [#allocation3], 32
    $region89: #{_fwd.1} parent=1 // pred_fallthru
      _
    %2076 = vsyncpa [#allocation3], 1

</llo_original>
